<compile_context>
chip_gen: v7x
topology: tpu7x:2x2x1
jax: 0.10.0
libtpu: 0.0.40
codegen_flags: <defaults>
</compile_context>

<pallas_src>
import functools
import math

import jax
import jax.numpy as jnp
from jax import lax
from jax.experimental import pallas as pl
from jax.experimental.pallas import tpu as pltpu

_F32 = jnp.float32
_BF16 = jnp.bfloat16


# --------------------------------------------------------------------------- helpers
def _layer_norm(x, w, b, eps=1e-5):
    mu = jnp.mean(x, axis=-1, keepdims=True)
    xc = x - mu
    var = jnp.mean(xc * xc, axis=-1, keepdims=True)
    return xc * lax.rsqrt(var + eps) * w + b


def _gelu(x, exact):
    if exact:  # torch.nn.functional.gelu default (erf form)
        return 0.5 * x * (1.0 + lax.erf(x * (1.0 / math.sqrt(2.0))))
    # tanh approximation: moves the transcendental to the EUP slot (useful when the
    # exact-erf VALU polynomial over (L, M) is the saturating slot, worst on v5e).
    c = math.sqrt(2.0 / math.pi)
    return 0.5 * x * (1.0 + jnp.tanh(c * (x + 0.044715 * x * x * x)))


def _mha_heads(qb, kb, vb, wo_ref, bo_ref, heads_ref, nhead):
    """Multi-head attention core.

    qb: (Lq, E) bf16, already scaled by 1/sqrt(dh); kb, vb: (L, E) bf16.
    Each head's result is stored into the (Lq, E) bf16 VMEM scratch `heads_ref` at its
    lane offset, then ONE fused (Lq,E)@(E,E) out-projection runs at full MXU
    contraction depth (K=E) instead of nhead matmuls at K=dh.
    Returns the (Lq, E) f32 attention output (out-proj + bias).
    """
    Lq, E = qb.shape
    dh = E // nhead
    for h in range(nhead):
        lo, hi = h * dh, (h + 1) * dh
        # q @ k^T via contracting dims (no transposed copy of k).
        s = lax.dot_general(qb[:, lo:hi], kb[:, lo:hi],
                            (((1,), (1,)), ((), ())),
                            preferred_element_type=_F32)            # (Lq, L) f32
        s = s - jnp.max(s, axis=-1, keepdims=True)
        p = jnp.exp(s)
        denom = jnp.sum(p, axis=-1, keepdims=True)                  # f32 row-sum first,
        pb = p.astype(_BF16)                                        # then drop p to bf16
        head = jnp.dot(pb, vb[:, lo:hi], preferred_element_type=_F32)   # (Lq, dh)
        # Exact reciprocal: only (Lq, 1) values, so the approx-EUP saving is negligible
        # and exactness avoids error compounding when this layer is stacked.
        heads_ref[:, lo:hi] = (head * pl.reciprocal(denom, approx=False)).astype(_BF16)
    return jnp.dot(heads_ref[...], wo_ref[...],
                   preferred_element_type=_F32) + bo_ref[...]


def _mlp(x1, ln2w_ref, ln2b_ref, w1_ref, b1_ref, w2_ref, b2_ref, exact_gelu):
    t = _layer_norm(x1, ln2w_ref[...], ln2b_ref[...])
    h = jnp.dot(t.astype(_BF16), w1_ref[...], preferred_element_type=_F32) + b1_ref[...]
    h = _gelu(h, exact_gelu)
    # TODO(synk): tile this over M (and attention over key blocks, flash-style) once
    # L*M / L*L footprints approach the VMEM cap; q_tiles already bounds the L factor.
    return jnp.dot(h.astype(_BF16), w2_ref[...], preferred_element_type=_F32) + b2_ref[...]


# --------------------------------------------------------------------------- kernels
def _tsal_kernel(nhead, exact_gelu, pos_varying, *refs):
    """Untiled kernel: one batch element per grid step (grid = (B,))."""
    if pos_varying:
        (x_ref, pos_ref, ln1w, ln1b, wqk, bqk, wv, bv,
         wo, bo, ln2w, ln2b, w1, b1, w2, b2, out_ref, heads_ref) = refs
    else:
        (x_ref, add_ref, ln1w, ln1b, wqkv, bqkv,
         wo, bo, ln2w, ln2b, w1, b1, w2, b2, out_ref, heads_ref) = refs

    x = x_ref[0]                                        # (L, E) f32
    E = x.shape[1]
    t2 = _layer_norm(x, ln1w[...], ln1b[...])

    if pos_varying:
        # q = k = LN1(x) + pos ; v = LN1(x). Fused (E, 2E) q|k projection,
        # softmax scale folded into the q half of the weights.
        qk_in = (t2 + pos_ref[0]).astype(_BF16)
        qk = jnp.dot(qk_in, wqk[...], preferred_element_type=_F32) + bqk[...]
        v = jnp.dot(t2.astype(_BF16), wv[...], preferred_element_type=_F32) + bv[...]
        qkb = qk.astype(_BF16)
        qb, kb, vb = qkb[:, :E], qkb[:, E:], v.astype(_BF16)
    else:
        # Batch-invariant query_pos: pos @ W was folded into a grid-invariant (L, 3E)
        # additive term in the wrapper, so q|k|v is ONE (E, 3E) MXU matmul driven by
        # LN1(x) only (no per-step pos add, no separate bf16 cast of q|k input).
        qkv = (jnp.dot(t2.astype(_BF16), wqkv[...], preferred_element_type=_F32)
               + bqkv[...] + add_ref[...])
        qkvb = qkv.astype(_BF16)
        qb, kb, vb = qkvb[:, :E], qkvb[:, E:2 * E], qkvb[:, 2 * E:]

    attn = _mha_heads(qb, kb, vb, wo, bo, heads_ref, nhead)
    x1 = x + attn
    y = x1 + _mlp(x1, ln2w, ln2b, w1, b1, w2, b2, exact_gelu)
    out_ref[0] = y


def _tsal_kernel_qtiled(nhead, exact_gelu, *refs):
    """Query-block-tiled kernel: grid = (B, n_q), both axes parallel (v7x: 2 TCs).

    Requires batch-invariant query_pos (additive terms precomputed in the wrapper).
    K/V (and LN1 over the full sequence) are recomputed per query tile; that extra
    work is small versus the 2x TensorCore parallelism it buys when B is small.
    """
    (xq_ref, xf_ref, addq_ref, addk_ref, ln1w, ln1b,
     wq, bq, wkv, bkv, wo, bo, ln2w, ln2b, w1, b1, w2, b2,
     out_ref, heads_ref) = refs

    xq = xq_ref[0]                                      # (Lq, E) f32 — this query tile
    xf = xf_ref[0]                                      # (L,  E) f32 — full sequence
    E = xq.shape[1]

    # K/V path over the full sequence (fused (E, 2E) k|v projection).
    t2f = _layer_norm(xf, ln1w[...], ln1b[...])
    kv = jnp.dot(t2f.astype(_BF16), wkv[...], preferred_element_type=_F32) + bkv[...]
    kb = (kv[:, :E] + addk_ref[...]).astype(_BF16)      # + pos @ Wk (grid-invariant)
    vb = kv[:, E:].astype(_BF16)

    # Q path only over this tile's rows (weights pre-scaled by 1/sqrt(dh)).
    t2q = _layer_norm(xq, ln1w[...], ln1b[...])
    q = (jnp.dot(t2q.astype(_BF16), wq[...], preferred_element_type=_F32)
         + bq[...] + addq_ref[...])                     # + pos_rows @ Wq * scale
    qb = q.astype(_BF16)

    attn = _mha_heads(qb, kb, vb, wo, bo, heads_ref, nhead)
    x1 = xq + attn
    y = x1 + _mlp(x1, ln2w, ln2b, w1, b1, w2, b2, exact_gelu)
    out_ref[0] = y


# --------------------------------------------------------------------------- wrapper
def _vmem_limit_bytes(L, Lq, E, M):
    f4, b2 = 4, 2
    weights = (3 * E * E + E * E + 2 * E * M) * b2 + (8 * E + M) * f4
    addends = 3 * L * E * f4
    acts = (L * E + Lq * E) * f4 * 2 * 2              # x (full + tile) and out, 2x buffered
    tmp = L * 3 * E * (f4 + b2)                       # qkv f32 + bf16
    tmp += Lq * L * (f4 + b2)                         # per-head scores (f32 + bf16)
    tmp += Lq * E * (b2 + 3 * f4)                     # heads scratch + attn/x1/y
    tmp += Lq * M * (f4 + b2)                         # MLP hidden
    est = 2 * (weights + addends + acts + tmp)        # ~2x headroom for compiler temps
    try:
        cap = int(pltpu.get_tpu_info().vmem_capacity_bytes)
    except Exception:                                 # unknown chip: assume v7x (64 MiB)
        cap = 64 * 2 ** 20
    cap = (cap * 3) // 4                              # leave 25% for Mosaic scratch/sems
    return int(max(32 * 2 ** 20, min(cap, est)))


def transformer_sa_layer(tgt, query_pos, params, *, nhead, q_tiles=1, exact_gelu=True):
    """TransformerSALayer forward.

    tgt: (L, B, E) float32; query_pos: None, (L, E), (L, 1, E) or (L, B, E).
    q_tiles > 1 splits the query dimension into a second parallel grid axis (intended
    for v7x's two TensorCores when B is small); it requires a batch-invariant
    query_pos and L % q_tiles == 0 with (L // q_tiles) % 8 == 0.
    Returns (L, B, E) float32.
    """
    L, B, E = tgt.shape
    M = params["w1"].shape[0]
    assert E % nhead == 0
    dh = E // nhead
    scale = 1.0 / math.sqrt(dh)
    f32, bf16 = _F32, _BF16

    # ---- classify query_pos (batch-varying vs. batch-invariant) ----
    pos_varying = False
    pos2d = None
    if query_pos is None:
        pos2d = jnp.zeros((L, E), f32)
    elif query_pos.ndim == 2:
        pos2d = query_pos.astype(f32)
    elif query_pos.shape[1] == 1:
        pos2d = query_pos[:, 0, :].astype(f32)
    elif query_pos.shape[1] == B:
        pos_varying = True
    else:
        raise ValueError("query_pos batch dim must be 1 or B")

    if q_tiles > 1:
        if pos_varying:
            raise ValueError("q_tiles > 1 requires a batch-invariant query_pos "
                             "(shape (L, E) or (L, 1, E)).")
        if L % q_tiles != 0 or (L // q_tiles) % 8 != 0:
            raise ValueError("L must split into q_tiles blocks of length %8 == 0.")
    Lq = L // q_tiles

    # ---- one-time parameter prep (transpose to x @ W form, fold softmax scale,
    #      cast matmul operands to bf16 for the MXU) ----
    Wq = params["in_proj_weight"][:E]
    Wk = params["in_proj_weight"][E:2 * E]
    Wv = params["in_proj_weight"][2 * E:]
    bq = params["in_proj_bias"][:E]
    bk = params["in_proj_bias"][E:2 * E]
    bv = params["in_proj_bias"][2 * E:]

    wo = params["out_proj_weight"].T.astype(bf16)
    bo = params["out_proj_bias"].reshape(1, E).astype(f32)
    w1 = params["w1"].T.astype(bf16)
    b1 = params["b1"].reshape(1, M).astype(f32)
    w2 = params["w2"].T.astype(bf16)
    b2 = params["b2"].reshape(1, E).astype(f32)
    ln1w = params["ln1_w"].reshape(1, E).astype(f32)
    ln1b = params["ln1_b"].reshape(1, E).astype(f32)
    ln2w = params["ln2_w"].reshape(1, E).astype(f32)
    ln2b = params["ln2_b"].reshape(1, E).astype(f32)
    tail_weights = (wo, bo, ln2w, ln2b, w1, b1, w2, b2)

    # Contiguous (B, L, E) layout: one wrapper transpose, lane-dense L*E slabs per step.
    x_bl = jnp.transpose(tgt, (1, 0, 2)).astype(f32)

    # Grid-invariant inputs use a constant index_map, so Pallas fetches them once.
    if q_tiles == 1:
        cmap = lambda b: (0, 0)
        dims = ("parallel",)
    else:
        cmap = lambda b, q: (0, 0)
        dims = ("parallel", "parallel")

    def const_spec(a):
        return pl.BlockSpec(a.shape, cmap)

    cp = pltpu.CompilerParams(
        dimension_semantics=dims,
        vmem_limit_bytes=_vmem_limit_bytes(L, Lq, E, M))

    if q_tiles == 1:
        if pos_varying:
            wqk = jnp.concatenate([Wq.T * scale, Wk.T], axis=1).astype(bf16)       # (E, 2E)
            bqk = jnp.concatenate([bq * scale, bk]).reshape(1, 2 * E).astype(f32)
            wv_t = Wv.T.astype(bf16)
            bvr = bv.reshape(1, E).astype(f32)
            pos_bl = jnp.transpose(query_pos, (1, 0, 2)).astype(f32)
            weights = (ln1w, ln1b, wqk, bqk, wv_t, bvr) + tail_weights
            act_in = [x_bl, pos_bl]
            act_specs = [pl.BlockSpec((1, L, E), lambda b: (b, 0, 0)),
                         pl.BlockSpec((1, L, E), lambda b: (b, 0, 0))]
        else:
            wqkv = jnp.concatenate([Wq.T * scale, Wk.T, Wv.T], axis=1).astype(bf16)  # (E, 3E)
            bqkv = jnp.concatenate([bq * scale, bk, bv]).reshape(1, 3 * E).astype(f32)
            addend = jnp.concatenate(
                [pos2d @ (Wq.T * scale), pos2d @ Wk.T, jnp.zeros((L, E), f32)],
                axis=1).astype(f32)                                                  # (L, 3E)
            weights = (ln1w, ln1b, wqkv, bqkv) + tail_weights
            act_in = [x_bl, addend]
            act_specs = [pl.BlockSpec((1, L, E), lambda b: (b, 0, 0)),
                         const_spec(addend)]

        kernel = functools.partial(_tsal_kernel, nhead, exact_gelu, pos_varying)
        fn = pl.pallas_call(
            kernel,
            out_shape=jax.ShapeDtypeStruct((B, L, E), f32),
            grid_spec=pltpu.PrefetchScalarGridSpec(
                num_scalar_prefetch=0,
                grid=(B,),
                in_specs=act_specs + [const_spec(w) for w in weights],
                out_specs=pl.BlockSpec((1, L, E), lambda b: (b, 0, 0)),
                scratch_shapes=[pltpu.VMEM((L, E), bf16)]),       # fused out-proj buffer
            compiler_params=cp)
        out = fn(*act_in, *weights)
    else:
        # TODO(synk): when L is very small, additionally pack several batch rows per
        # grid step to fill the MXU rows and amortize per-step overhead.
        wq_t = (Wq.T * scale).astype(bf16)                        # (E, E), scale folded
        bq_s = (bq * scale).reshape(1, E).astype(f32)
        wkv = jnp.concatenate([Wk.T, Wv.T], axis=1).astype(bf16)  # (E, 2E)
        bkv = jnp.concatenate([bk, bv]).reshape(1, 2 * E).astype(f32)
        addq = (pos2d @ (Wq.T * scale)).astype(f32)               # (L, E)
        addk = (pos2d @ Wk.T).astype(f32)                         # (L, E)
        weights = (ln1w, ln1b, wq_t, bq_s, wkv, bkv) + tail_weights

        in_specs = [pl.BlockSpec((1, Lq, E), lambda b, q: (b, q, 0)),   # x, this query tile
                    pl.BlockSpec((1, L, E), lambda b, q: (b, 0, 0)),    # x, full sequence
                    pl.BlockSpec((Lq, E), lambda b, q: (q, 0)),         # q-half pos addend rows
                    pl.BlockSpec((L, E), lambda b, q: (0, 0))]          # k-half pos addend
        in_specs += [const_spec(w) for w in weights]

        kernel = functools.partial(_tsal_kernel_qtiled, nhead, exact_gelu)
        fn = pl.pallas_call(
            kernel,
            out_shape=jax.ShapeDtypeStruct((B, L, E), f32),
            grid_spec=pltpu.PrefetchScalarGridSpec(
                num_scalar_prefetch=0,
                grid=(B, q_tiles),
                in_specs=in_specs,
                out_specs=pl.BlockSpec((1, Lq, E), lambda b, q: (b, q, 0)),
                scratch_shapes=[pltpu.VMEM((Lq, E), bf16)]),
            compiler_params=cp)
        out = fn(x_bl, x_bl, addq, addk, *weights)

    return jnp.transpose(out, (1, 0, 2))


# ---------------- pure-JAX reference (for the correctness check) ----------------
def _ref_forward(tgt, query_pos, params, *, nhead):
    L, B, E = tgt.shape
    dh = E // nhead

    def ln(x, w, b):
        mu = jnp.mean(x, axis=-1, keepdims=True)
        var = jnp.mean((x - mu) ** 2, axis=-1, keepdims=True)
        return (x - mu) / jnp.sqrt(var + 1e-5) * w + b

    t2 = ln(tgt, params["ln1_w"], params["ln1_b"])
    qk_in = t2 + query_pos
    Wq = params["in_proj_weight"][:E]
    Wk = params["in_proj_weight"][E:2 * E]
    Wv = params["in_proj_weight"][2 * E:]
    bq = params["in_proj_bias"][:E]
    bk = params["in_proj_bias"][E:2 * E]
    bv = params["in_proj_bias"][2 * E:]
    q = qk_in @ Wq.T + bq
    k = qk_in @ Wk.T + bk
    v = t2 @ Wv.T + bv
    qh = q.reshape(L, B, nhead, dh)
    kh = k.reshape(L, B, nhead, dh)
    vh = v.reshape(L, B, nhead, dh)
    s = jnp.einsum("qbhd,kbhd->bhqk", qh, kh) / math.sqrt(dh)
    p = jax.nn.softmax(s, axis=-1)
    a = jnp.einsum("bhqk,kbhd->qbhd", p, vh).reshape(L, B, E)
    a = a @ params["out_proj_weight"].T + params["out_proj_bias"]
    x1 = tgt + a
    t2b = ln(x1, params["ln2_w"], params["ln2_b"])
    h = t2b @ params["w1"].T + params["b1"]
    h = 0.5 * h * (1.0 + lax.erf(h / math.sqrt(2.0)))
    h = h @ params["w2"].T + params["b2"]
    return x1 + h


if __name__ == "__main__":
    L, B, E, NHEAD, M = 16, 2, 128, 4, 256

    key = jax.random.PRNGKey(0)
    ks = jax.random.split(key, 13)

    params = {
        "in_proj_weight": 0.02 * jax.random.normal(ks[0], (3 * E, E), jnp.float32),
        "in_proj_bias": 0.01 * jax.random.normal(ks[6], (3 * E,), jnp.float32),
        "out_proj_weight": 0.02 * jax.random.normal(ks[1], (E, E), jnp.float32),
        "out_proj_bias": 0.01 * jax.random.normal(ks[7], (E,), jnp.float32),
        "w1": 0.02 * jax.random.normal(ks[2], (M, E), jnp.float32),
        "b1": 0.01 * jax.random.normal(ks[8], (M,), jnp.float32),
        "w2": 0.02 * jax.random.normal(ks[3], (E, M), jnp.float32),
        "b2": 0.01 * jax.random.normal(ks[9], (E,), jnp.float32),
        "ln1_w": 1.0 + 0.05 * jax.random.normal(ks[10], (E,), jnp.float32),
        "ln1_b": 0.01 * jax.random.normal(ks[11], (E,), jnp.float32),
        "ln2_w": jnp.ones((E,), jnp.float32),
        "ln2_b": jnp.zeros((E,), jnp.float32),
    }

    tgt = jax.random.normal(ks[4], (L, B, E), jnp.float32)
    pos_batched = jax.random.normal(ks[5], (L, B, E), jnp.float32)   # batch-varying pos
    pos_shared = jax.random.normal(ks[12], (L, 1, E), jnp.float32)   # batch-invariant pos

    # 1) primary path: per-batch query_pos, grid = (B,)
    out_var = transformer_sa_layer(tgt, pos_batched, params, nhead=NHEAD)
    ref_var = _ref_forward(tgt, pos_batched, params, nhead=NHEAD)

    # 2) batch-invariant query_pos -> fused (E, 3E) projection + grid-invariant addend
    out_inv = transformer_sa_layer(tgt, pos_shared, params, nhead=NHEAD)
    ref_inv = _ref_forward(tgt, jnp.broadcast_to(pos_shared, (L, B, E)), params, nhead=NHEAD)

    # 3) query-block tiled path (second parallel grid axis, e.g. v7x with small B)
    out_qt = transformer_sa_layer(tgt, pos_shared, params, nhead=NHEAD, q_tiles=2)

    for name, o, r in (("varying", out_var, ref_var),
                       ("invariant", out_inv, ref_inv),
                       ("qtiled", out_qt, ref_inv)):
        o = jax.block_until_ready(o)
        assert o.shape == (L, B, E), name
        err = float(jnp.max(jnp.abs(o - r)))
        # bf16 MXU operands with f32 accumulation => looser tolerance than pure f32.
        assert err < 2e-2, (name, err)

    print("KERNEL_OK")
</pallas_src>

<mosaic_0001>
module attributes {stable_mosaic.version = 11 : i64} {
  func.func @_tsal_kernel(%arg0: i32, %arg1: memref<1x16x128xf32, #tpu.memory_space<vmem>>, %arg2: memref<1x16x128xf32, #tpu.memory_space<vmem>>, %arg3: memref<1x128xf32, #tpu.memory_space<vmem>>, %arg4: memref<1x128xf32, #tpu.memory_space<vmem>>, %arg5: memref<128x256xbf16, #tpu.memory_space<vmem>>, %arg6: memref<1x256xf32, #tpu.memory_space<vmem>>, %arg7: memref<128x128xbf16, #tpu.memory_space<vmem>>, %arg8: memref<1x128xf32, #tpu.memory_space<vmem>>, %arg9: memref<128x128xbf16, #tpu.memory_space<vmem>>, %arg10: memref<1x128xf32, #tpu.memory_space<vmem>>, %arg11: memref<1x128xf32, #tpu.memory_space<vmem>>, %arg12: memref<1x128xf32, #tpu.memory_space<vmem>>, %arg13: memref<128x256xbf16, #tpu.memory_space<vmem>>, %arg14: memref<1x256xf32, #tpu.memory_space<vmem>>, %arg15: memref<256x128xbf16, #tpu.memory_space<vmem>>, %arg16: memref<1x128xf32, #tpu.memory_space<vmem>>, %arg17: memref<1x16x128xf32, #tpu.memory_space<vmem>>, %arg18: memref<16x128xbf16, #tpu.memory_space<vmem>>) attributes {dimension_semantics = [#tpu.dimension_semantics<parallel>], iteration_bounds = array<i64: 2>, scalar_prefetch = 0 : i64, scratch_operands = 1 : i64, tpu.core_type = #tpu.core_type<tc>, window_params = [{transform_indices = @transform_0, window_bounds = array<i64: 1, 16, 128>}, {transform_indices = @transform_1, window_bounds = array<i64: 1, 16, 128>}, {pipeline_mode = #tpu.pipeline_mode<synchronous>, transform_indices = @transform_2, window_bounds = array<i64: 1, 128>}, {pipeline_mode = #tpu.pipeline_mode<synchronous>, transform_indices = @transform_3, window_bounds = array<i64: 1, 128>}, {pipeline_mode = #tpu.pipeline_mode<synchronous>, transform_indices = @transform_4, window_bounds = array<i64: 128, 256>}, {pipeline_mode = #tpu.pipeline_mode<synchronous>, transform_indices = @transform_5, window_bounds = array<i64: 1, 256>}, {pipeline_mode = #tpu.pipeline_mode<synchronous>, transform_indices = @transform_6, window_bounds = array<i64: 128, 128>}, {pipeline_mode = #tpu.pipeline_mode<synchronous>, transform_indices = @transform_7, window_bounds = array<i64: 1, 128>}, {pipeline_mode = #tpu.pipeline_mode<synchronous>, transform_indices = @transform_8, window_bounds = array<i64: 128, 128>}, {pipeline_mode = #tpu.pipeline_mode<synchronous>, transform_indices = @transform_9, window_bounds = array<i64: 1, 128>}, {pipeline_mode = #tpu.pipeline_mode<synchronous>, transform_indices = @transform_10, window_bounds = array<i64: 1, 128>}, {pipeline_mode = #tpu.pipeline_mode<synchronous>, transform_indices = @transform_11, window_bounds = array<i64: 1, 128>}, {pipeline_mode = #tpu.pipeline_mode<synchronous>, transform_indices = @transform_12, window_bounds = array<i64: 128, 256>}, {pipeline_mode = #tpu.pipeline_mode<synchronous>, transform_indices = @transform_13, window_bounds = array<i64: 1, 256>}, {pipeline_mode = #tpu.pipeline_mode<synchronous>, transform_indices = @transform_14, window_bounds = array<i64: 256, 128>}, {pipeline_mode = #tpu.pipeline_mode<synchronous>, transform_indices = @transform_15, window_bounds = array<i64: 1, 128>}, {transform_indices = @transform_16, window_bounds = array<i64: 1, 16, 128>}]} {
    %c0 = arith.constant 0 : index
    %c0_0 = arith.constant 0 : index
    %c0_1 = arith.constant 0 : index
    %0 = vector.load %arg1[%c0, %c0_0, %c0_1] : memref<1x16x128xf32, #tpu.memory_space<vmem>>, vector<1x16x128xf32>
    %1 = vector.shape_cast %0 : vector<1x16x128xf32> to vector<16x128xf32>
    %c0_2 = arith.constant 0 : index
    %c0_3 = arith.constant 0 : index
    %2 = vector.load %arg3[%c0_2, %c0_3] : memref<1x128xf32, #tpu.memory_space<vmem>>, vector<1x128xf32>
    %c0_4 = arith.constant 0 : index
    %c0_5 = arith.constant 0 : index
    %3 = vector.load %arg4[%c0_4, %c0_5] : memref<1x128xf32, #tpu.memory_space<vmem>>, vector<1x128xf32>
    %cst = arith.constant dense<0.000000e+00> : vector<16xf32>
    %4 = vector.multi_reduction <add>, %1, %cst [1] : vector<16x128xf32> to vector<16xf32>
    %5 = vector.shape_cast %4 : vector<16xf32> to vector<16x1xf32>
    %cst_6 = arith.constant 1.280000e+02 : f32
    %6 = vector.broadcast %cst_6 : f32 to vector<16x1xf32>
    %7 = arith.divf %5, %6 : vector<16x1xf32>
    %8 = vector.broadcast %7 : vector<16x1xf32> to vector<16x128xf32>
    %9 = arith.subf %1, %8 : vector<16x128xf32>
    %10 = arith.mulf %9, %9 : vector<16x128xf32>
    %cst_7 = arith.constant dense<0.000000e+00> : vector<16xf32>
    %11 = vector.multi_reduction <add>, %10, %cst_7 [1] : vector<16x128xf32> to vector<16xf32>
    %12 = vector.shape_cast %11 : vector<16xf32> to vector<16x1xf32>
    %cst_8 = arith.constant 1.280000e+02 : f32
    %13 = vector.broadcast %cst_8 : f32 to vector<16x1xf32>
    %14 = arith.divf %12, %13 : vector<16x1xf32>
    %cst_9 = arith.constant 9.99999974E-6 : f32
    %15 = vector.broadcast %cst_9 : f32 to vector<16x1xf32>
    %16 = arith.addf %14, %15 : vector<16x1xf32>
    %17 = math.rsqrt %16 : vector<16x1xf32>
    %18 = vector.broadcast %17 : vector<16x1xf32> to vector<16x128xf32>
    %19 = arith.mulf %9, %18 : vector<16x128xf32>
    %20 = vector.broadcast %2 : vector<1x128xf32> to vector<16x128xf32>
    %21 = arith.mulf %19, %20 : vector<16x128xf32>
    %22 = vector.broadcast %3 : vector<1x128xf32> to vector<16x128xf32>
    %23 = arith.addf %21, %22 : vector<16x128xf32>
    %c0_10 = arith.constant 0 : index
    %c0_11 = arith.constant 0 : index
    %c0_12 = arith.constant 0 : index
    %24 = vector.load %arg2[%c0_10, %c0_11, %c0_12] : memref<1x16x128xf32, #tpu.memory_space<vmem>>, vector<1x16x128xf32>
    %25 = vector.shape_cast %24 : vector<1x16x128xf32> to vector<16x128xf32>
    %26 = arith.addf %23, %25 : vector<16x128xf32>
    %27 = arith.truncf %26 : vector<16x128xf32> to vector<16x128xbf16>
    %c0_13 = arith.constant 0 : index
    %c0_14 = arith.constant 0 : index
    %28 = vector.load %arg5[%c0_13, %c0_14] : memref<128x256xbf16, #tpu.memory_space<vmem>>, vector<128x256xbf16>
    %cst_15 = arith.constant dense<0.000000e+00> : vector<16x256xf32>
    %29 = tpu.matmul %27, %28, %cst_15 {dimension_numbers = #tpu.dot_dimension_numbers<[1], [0], [0], [1], [0, 0, 1, 1], [], []>} : vector<16x128xbf16>, vector<128x256xbf16>, vector<16x256xf32> -> vector<16x256xf32>
    %c0_16 = arith.constant 0 : index
    %c0_17 = arith.constant 0 : index
    %30 = vector.load %arg6[%c0_16, %c0_17] : memref<1x256xf32, #tpu.memory_space<vmem>>, vector<1x256xf32>
    %31 = vector.broadcast %30 : vector<1x256xf32> to vector<16x256xf32>
    %32 = arith.addf %29, %31 : vector<16x256xf32>
    %33 = arith.truncf %23 : vector<16x128xf32> to vector<16x128xbf16>
    %c0_18 = arith.constant 0 : index
    %c0_19 = arith.constant 0 : index
    %34 = vector.load %arg7[%c0_18, %c0_19] : memref<128x128xbf16, #tpu.memory_space<vmem>>, vector<128x128xbf16>
    %cst_20 = arith.constant dense<0.000000e+00> : vector<16x128xf32>
    %35 = tpu.matmul %33, %34, %cst_20 {dimension_numbers = #tpu.dot_dimension_numbers<[1], [0], [0], [1], [0, 0, 1, 1], [], []>} : vector<16x128xbf16>, vector<128x128xbf16>, vector<16x128xf32> -> vector<16x128xf32>
    %c0_21 = arith.constant 0 : index
    %c0_22 = arith.constant 0 : index
    %36 = vector.load %arg8[%c0_21, %c0_22] : memref<1x128xf32, #tpu.memory_space<vmem>>, vector<1x128xf32>
    %37 = vector.broadcast %36 : vector<1x128xf32> to vector<16x128xf32>
    %38 = arith.addf %35, %37 : vector<16x128xf32>
    %39 = arith.truncf %32 : vector<16x256xf32> to vector<16x256xbf16>
    %40 = vector.extract_strided_slice %39 {offsets = [0, 0], sizes = [16, 128], strides = [1, 1]} : vector<16x256xbf16> to vector<16x128xbf16>
    %41 = vector.extract_strided_slice %39 {offsets = [0, 128], sizes = [16, 128], strides = [1, 1]} : vector<16x256xbf16> to vector<16x128xbf16>
    %42 = arith.truncf %38 : vector<16x128xf32> to vector<16x128xbf16>
    %43 = vector.extract_strided_slice %40 {offsets = [0, 0], sizes = [16, 32], strides = [1, 1]} : vector<16x128xbf16> to vector<16x32xbf16>
    %44 = vector.extract_strided_slice %41 {offsets = [0, 0], sizes = [16, 32], strides = [1, 1]} : vector<16x128xbf16> to vector<16x32xbf16>
    %cst_23 = arith.constant dense<0.000000e+00> : vector<16x16xf32>
    %45 = tpu.matmul %43, %44, %cst_23 {dimension_numbers = #tpu.dot_dimension_numbers<[1], [1], [0], [0], [0, 0, 1, 0], [], []>} : vector<16x32xbf16>, vector<16x32xbf16>, vector<16x16xf32> -> vector<16x16xf32>
    %cst_24 = arith.constant dense<0xFF800000> : vector<16xf32>
    %46 = vector.multi_reduction <maximumf>, %45, %cst_24 [1] : vector<16x16xf32> to vector<16xf32>
    %47 = vector.shape_cast %46 : vector<16xf32> to vector<16x1xf32>
    %48 = vector.broadcast %47 : vector<16x1xf32> to vector<16x16xf32>
    %49 = arith.subf %45, %48 : vector<16x16xf32>
    %50 = math.exp %49 : vector<16x16xf32>
    %cst_25 = arith.constant dense<0.000000e+00> : vector<16xf32>
    %51 = vector.multi_reduction <add>, %50, %cst_25 [1] : vector<16x16xf32> to vector<16xf32>
    %52 = vector.shape_cast %51 : vector<16xf32> to vector<16x1xf32>
    %53 = arith.truncf %50 : vector<16x16xf32> to vector<16x16xbf16>
    %54 = vector.extract_strided_slice %42 {offsets = [0, 0], sizes = [16, 32], strides = [1, 1]} : vector<16x128xbf16> to vector<16x32xbf16>
    %cst_26 = arith.constant dense<0.000000e+00> : vector<16x32xf32>
    %55 = tpu.matmul %53, %54, %cst_26 {dimension_numbers = #tpu.dot_dimension_numbers<[1], [0], [0], [1], [0, 0, 1, 1], [], []>} : vector<16x16xbf16>, vector<16x32xbf16>, vector<16x32xf32> -> vector<16x32xf32>
    %56 = tpu.reciprocal %52 : vector<16x1xf32> -> vector<16x1xf32>
    %57 = vector.broadcast %56 : vector<16x1xf32> to vector<16x32xf32>
    %58 = arith.mulf %55, %57 : vector<16x32xf32>
    %59 = arith.truncf %58 : vector<16x32xf32> to vector<16x32xbf16>
    %c0_27 = arith.constant 0 : index
    %c0_28 = arith.constant 0 : index
    %60 = vector.load %arg18[%c0_27, %c0_28] : memref<16x128xbf16, #tpu.memory_space<vmem>>, vector<16x32xbf16>
    tpu.vector_store %arg18[%c0_27, %c0_28], %59 {strides = array<i32>} : memref<16x128xbf16, #tpu.memory_space<vmem>>, vector<16x32xbf16>,
    %61 = vector.extract_strided_slice %40 {offsets = [0, 32], sizes = [16, 32], strides = [1, 1]} : vector<16x128xbf16> to vector<16x32xbf16>
    %62 = vector.extract_strided_slice %41 {offsets = [0, 32], sizes = [16, 32], strides = [1, 1]} : vector<16x128xbf16> to vector<16x32xbf16>
    %cst_29 = arith.constant dense<0.000000e+00> : vector<16x16xf32>
    %63 = tpu.matmul %61, %62, %cst_29 {dimension_numbers = #tpu.dot_dimension_numbers<[1], [1], [0], [0], [0, 0, 1, 0], [], []>} : vector<16x32xbf16>, vector<16x32xbf16>, vector<16x16xf32> -> vector<16x16xf32>
    %cst_30 = arith.constant dense<0xFF800000> : vector<16xf32>
    %64 = vector.multi_reduction <maximumf>, %63, %cst_30 [1] : vector<16x16xf32> to vector<16xf32>
    %65 = vector.shape_cast %64 : vector<16xf32> to vector<16x1xf32>
    %66 = vector.broadcast %65 : vector<16x1xf32> to vector<16x16xf32>
    %67 = arith.subf %63, %66 : vector<16x16xf32>
    %68 = math.exp %67 : vector<16x16xf32>
    %cst_31 = arith.constant dense<0.000000e+00> : vector<16xf32>
    %69 = vector.multi_reduction <add>, %68, %cst_31 [1] : vector<16x16xf32> to vector<16xf32>
    %70 = vector.shape_cast %69 : vector<16xf32> to vector<16x1xf32>
    %71 = arith.truncf %68 : vector<16x16xf32> to vector<16x16xbf16>
    %72 = vector.extract_strided_slice %42 {offsets = [0, 32], sizes = [16, 32], strides = [1, 1]} : vector<16x128xbf16> to vector<16x32xbf16>
    %cst_32 = arith.constant dense<0.000000e+00> : vector<16x32xf32>
    %73 = tpu.matmul %71, %72, %cst_32 {dimension_numbers = #tpu.dot_dimension_numbers<[1], [0], [0], [1], [0, 0, 1, 1], [], []>} : vector<16x16xbf16>, vector<16x32xbf16>, vector<16x32xf32> -> vector<16x32xf32>
    %74 = tpu.reciprocal %70 : vector<16x1xf32> -> vector<16x1xf32>
    %75 = vector.broadcast %74 : vector<16x1xf32> to vector<16x32xf32>
    %76 = arith.mulf %73, %75 : vector<16x32xf32>
    %77 = arith.truncf %76 : vector<16x32xf32> to vector<16x32xbf16>
    %c0_33 = arith.constant 0 : index
    %c32 = arith.constant 32 : index
    %78 = vector.load %arg18[%c0_33, %c32] : memref<16x128xbf16, #tpu.memory_space<vmem>>, vector<16x32xbf16>
    tpu.vector_store %arg18[%c0_33, %c32], %77 {strides = array<i32>} : memref<16x128xbf16, #tpu.memory_space<vmem>>, vector<16x32xbf16>,
    %79 = vector.extract_strided_slice %40 {offsets = [0, 64], sizes = [16, 32], strides = [1, 1]} : vector<16x128xbf16> to vector<16x32xbf16>
    %80 = vector.extract_strided_slice %41 {offsets = [0, 64], sizes = [16, 32], strides = [1, 1]} : vector<16x128xbf16> to vector<16x32xbf16>
    %cst_34 = arith.constant dense<0.000000e+00> : vector<16x16xf32>
    %81 = tpu.matmul %79, %80, %cst_34 {dimension_numbers = #tpu.dot_dimension_numbers<[1], [1], [0], [0], [0, 0, 1, 0], [], []>} : vector<16x32xbf16>, vector<16x32xbf16>, vector<16x16xf32> -> vector<16x16xf32>
    %cst_35 = arith.constant dense<0xFF800000> : vector<16xf32>
    %82 = vector.multi_reduction <maximumf>, %81, %cst_35 [1] : vector<16x16xf32> to vector<16xf32>
    %83 = vector.shape_cast %82 : vector<16xf32> to vector<16x1xf32>
    %84 = vector.broadcast %83 : vector<16x1xf32> to vector<16x16xf32>
    %85 = arith.subf %81, %84 : vector<16x16xf32>
    %86 = math.exp %85 : vector<16x16xf32>
    %cst_36 = arith.constant dense<0.000000e+00> : vector<16xf32>
    %87 = vector.multi_reduction <add>, %86, %cst_36 [1] : vector<16x16xf32> to vector<16xf32>
    %88 = vector.shape_cast %87 : vector<16xf32> to vector<16x1xf32>
    %89 = arith.truncf %86 : vector<16x16xf32> to vector<16x16xbf16>
    %90 = vector.extract_strided_slice %42 {offsets = [0, 64], sizes = [16, 32], strides = [1, 1]} : vector<16x128xbf16> to vector<16x32xbf16>
    %cst_37 = arith.constant dense<0.000000e+00> : vector<16x32xf32>
    %91 = tpu.matmul %89, %90, %cst_37 {dimension_numbers = #tpu.dot_dimension_numbers<[1], [0], [0], [1], [0, 0, 1, 1], [], []>} : vector<16x16xbf16>, vector<16x32xbf16>, vector<16x32xf32> -> vector<16x32xf32>
    %92 = tpu.reciprocal %88 : vector<16x1xf32> -> vector<16x1xf32>
    %93 = vector.broadcast %92 : vector<16x1xf32> to vector<16x32xf32>
    %94 = arith.mulf %91, %93 : vector<16x32xf32>
    %95 = arith.truncf %94 : vector<16x32xf32> to vector<16x32xbf16>
    %c0_38 = arith.constant 0 : index
    %c64 = arith.constant 64 : index
    %96 = vector.load %arg18[%c0_38, %c64] : memref<16x128xbf16, #tpu.memory_space<vmem>>, vector<16x32xbf16>
    tpu.vector_store %arg18[%c0_38, %c64], %95 {strides = array<i32>} : memref<16x128xbf16, #tpu.memory_space<vmem>>, vector<16x32xbf16>,
    %97 = vector.extract_strided_slice %40 {offsets = [0, 96], sizes = [16, 32], strides = [1, 1]} : vector<16x128xbf16> to vector<16x32xbf16>
    %98 = vector.extract_strided_slice %41 {offsets = [0, 96], sizes = [16, 32], strides = [1, 1]} : vector<16x128xbf16> to vector<16x32xbf16>
    %cst_39 = arith.constant dense<0.000000e+00> : vector<16x16xf32>
    %99 = tpu.matmul %97, %98, %cst_39 {dimension_numbers = #tpu.dot_dimension_numbers<[1], [1], [0], [0], [0, 0, 1, 0], [], []>} : vector<16x32xbf16>, vector<16x32xbf16>, vector<16x16xf32> -> vector<16x16xf32>
    %cst_40 = arith.constant dense<0xFF800000> : vector<16xf32>
    %100 = vector.multi_reduction <maximumf>, %99, %cst_40 [1] : vector<16x16xf32> to vector<16xf32>
    %101 = vector.shape_cast %100 : vector<16xf32> to vector<16x1xf32>
    %102 = vector.broadcast %101 : vector<16x1xf32> to vector<16x16xf32>
    %103 = arith.subf %99, %102 : vector<16x16xf32>
    %104 = math.exp %103 : vector<16x16xf32>
    %cst_41 = arith.constant dense<0.000000e+00> : vector<16xf32>
    %105 = vector.multi_reduction <add>, %104, %cst_41 [1] : vector<16x16xf32> to vector<16xf32>
    %106 = vector.shape_cast %105 : vector<16xf32> to vector<16x1xf32>
    %107 = arith.truncf %104 : vector<16x16xf32> to vector<16x16xbf16>
    %108 = vector.extract_strided_slice %42 {offsets = [0, 96], sizes = [16, 32], strides = [1, 1]} : vector<16x128xbf16> to vector<16x32xbf16>
    %cst_42 = arith.constant dense<0.000000e+00> : vector<16x32xf32>
    %109 = tpu.matmul %107, %108, %cst_42 {dimension_numbers = #tpu.dot_dimension_numbers<[1], [0], [0], [1], [0, 0, 1, 1], [], []>} : vector<16x16xbf16>, vector<16x32xbf16>, vector<16x32xf32> -> vector<16x32xf32>
    %110 = tpu.reciprocal %106 : vector<16x1xf32> -> vector<16x1xf32>
    %111 = vector.broadcast %110 : vector<16x1xf32> to vector<16x32xf32>
    %112 = arith.mulf %109, %111 : vector<16x32xf32>
    %113 = arith.truncf %112 : vector<16x32xf32> to vector<16x32xbf16>
    %c0_43 = arith.constant 0 : index
    %c96 = arith.constant 96 : index
    %114 = vector.load %arg18[%c0_43, %c96] : memref<16x128xbf16, #tpu.memory_space<vmem>>, vector<16x32xbf16>
    tpu.vector_store %arg18[%c0_43, %c96], %113 {strides = array<i32>} : memref<16x128xbf16, #tpu.memory_space<vmem>>, vector<16x32xbf16>,
    %c0_44 = arith.constant 0 : index
    %c0_45 = arith.constant 0 : index
    %115 = vector.load %arg18[%c0_44, %c0_45] : memref<16x128xbf16, #tpu.memory_space<vmem>>, vector<16x128xbf16>
    %c0_46 = arith.constant 0 : index
    %c0_47 = arith.constant 0 : index
    %116 = vector.load %arg9[%c0_46, %c0_47] : memref<128x128xbf16, #tpu.memory_space<vmem>>, vector<128x128xbf16>
    %cst_48 = arith.constant dense<0.000000e+00> : vector<16x128xf32>
    %117 = tpu.matmul %115, %116, %cst_48 {dimension_numbers = #tpu.dot_dimension_numbers<[1], [0], [0], [1], [0, 0, 1, 1], [], []>} : vector<16x128xbf16>, vector<128x128xbf16>, vector<16x128xf32> -> vector<16x128xf32>
    %c0_49 = arith.constant 0 : index
    %c0_50 = arith.constant 0 : index
    %118 = vector.load %arg10[%c0_49, %c0_50] : memref<1x128xf32, #tpu.memory_space<vmem>>, vector<1x128xf32>
    %119 = vector.broadcast %118 : vector<1x128xf32> to vector<16x128xf32>
    %120 = arith.addf %117, %119 : vector<16x128xf32>
    %121 = arith.addf %1, %120 : vector<16x128xf32>
    %c0_51 = arith.constant 0 : index
    %c0_52 = arith.constant 0 : index
    %122 = vector.load %arg11[%c0_51, %c0_52] : memref<1x128xf32, #tpu.memory_space<vmem>>, vector<1x128xf32>
    %c0_53 = arith.constant 0 : index
    %c0_54 = arith.constant 0 : index
    %123 = vector.load %arg12[%c0_53, %c0_54] : memref<1x128xf32, #tpu.memory_space<vmem>>, vector<1x128xf32>
    %cst_55 = arith.constant dense<0.000000e+00> : vector<16xf32>
    %124 = vector.multi_reduction <add>, %121, %cst_55 [1] : vector<16x128xf32> to vector<16xf32>
    %125 = vector.shape_cast %124 : vector<16xf32> to vector<16x1xf32>
    %cst_56 = arith.constant 1.280000e+02 : f32
    %126 = vector.broadcast %cst_56 : f32 to vector<16x1xf32>
    %127 = arith.divf %125, %126 : vector<16x1xf32>
    %128 = vector.broadcast %127 : vector<16x1xf32> to vector<16x128xf32>
    %129 = arith.subf %121, %128 : vector<16x128xf32>
    %130 = arith.mulf %129, %129 : vector<16x128xf32>
    %cst_57 = arith.constant dense<0.000000e+00> : vector<16xf32>
    %131 = vector.multi_reduction <add>, %130, %cst_57 [1] : vector<16x128xf32> to vector<16xf32>
    %132 = vector.shape_cast %131 : vector<16xf32> to vector<16x1xf32>
    %cst_58 = arith.constant 1.280000e+02 : f32
    %133 = vector.broadcast %cst_58 : f32 to vector<16x1xf32>
    %134 = arith.divf %132, %133 : vector<16x1xf32>
    %cst_59 = arith.constant 9.99999974E-6 : f32
    %135 = vector.broadcast %cst_59 : f32 to vector<16x1xf32>
    %136 = arith.addf %134, %135 : vector<16x1xf32>
    %137 = math.rsqrt %136 : vector<16x1xf32>
    %138 = vector.broadcast %137 : vector<16x1xf32> to vector<16x128xf32>
    %139 = arith.mulf %129, %138 : vector<16x128xf32>
    %140 = vector.broadcast %122 : vector<1x128xf32> to vector<16x128xf32>
    %141 = arith.mulf %139, %140 : vector<16x128xf32>
    %142 = vector.broadcast %123 : vector<1x128xf32> to vector<16x128xf32>
    %143 = arith.addf %141, %142 : vector<16x128xf32>
    %144 = arith.truncf %143 : vector<16x128xf32> to vector<16x128xbf16>
    %c0_60 = arith.constant 0 : index
    %c0_61 = arith.constant 0 : index
    %145 = vector.load %arg13[%c0_60, %c0_61] : memref<128x256xbf16, #tpu.memory_space<vmem>>, vector<128x256xbf16>
    %cst_62 = arith.constant dense<0.000000e+00> : vector<16x256xf32>
    %146 = tpu.matmul %144, %145, %cst_62 {dimension_numbers = #tpu.dot_dimension_numbers<[1], [0], [0], [1], [0, 0, 1, 1], [], []>} : vector<16x128xbf16>, vector<128x256xbf16>, vector<16x256xf32> -> vector<16x256xf32>
    %c0_63 = arith.constant 0 : index
    %c0_64 = arith.constant 0 : index
    %147 = vector.load %arg14[%c0_63, %c0_64] : memref<1x256xf32, #tpu.memory_space<vmem>>, vector<1x256xf32>
    %148 = vector.broadcast %147 : vector<1x256xf32> to vector<16x256xf32>
    %149 = arith.addf %146, %148 : vector<16x256xf32>
    %cst_65 = arith.constant 5.000000e-01 : f32
    %150 = vector.broadcast %cst_65 : f32 to vector<16x256xf32>
    %151 = arith.mulf %150, %149 : vector<16x256xf32>
    %cst_66 = arith.constant 0.707106769 : f32
    %152 = vector.broadcast %cst_66 : f32 to vector<16x256xf32>
    %153 = arith.mulf %149, %152 : vector<16x256xf32>
    %154 = math.erf %153 : vector<16x256xf32>
    %cst_67 = arith.constant 1.000000e+00 : f32
    %155 = vector.broadcast %cst_67 : f32 to vector<16x256xf32>
    %156 = arith.addf %155, %154 : vector<16x256xf32>
    %157 = arith.mulf %151, %156 : vector<16x256xf32>
    %158 = arith.truncf %157 : vector<16x256xf32> to vector<16x256xbf16>
    %c0_68 = arith.constant 0 : index
    %c0_69 = arith.constant 0 : index
    %159 = vector.load %arg15[%c0_68, %c0_69] : memref<256x128xbf16, #tpu.memory_space<vmem>>, vector<256x128xbf16>
    %cst_70 = arith.constant dense<0.000000e+00> : vector<16x128xf32>
    %160 = tpu.matmul %158, %159, %cst_70 {dimension_numbers = #tpu.dot_dimension_numbers<[1], [0], [0], [1], [0, 0, 1, 1], [], []>} : vector<16x256xbf16>, vector<256x128xbf16>, vector<16x128xf32> -> vector<16x128xf32>
    %c0_71 = arith.constant 0 : index
    %c0_72 = arith.constant 0 : index
    %161 = vector.load %arg16[%c0_71, %c0_72] : memref<1x128xf32, #tpu.memory_space<vmem>>, vector<1x128xf32>
    %162 = vector.broadcast %161 : vector<1x128xf32> to vector<16x128xf32>
    %163 = arith.addf %160, %162 : vector<16x128xf32>
    %164 = arith.addf %121, %163 : vector<16x128xf32>
    %c0_73 = arith.constant 0 : index
    %c0_74 = arith.constant 0 : index
    %c0_75 = arith.constant 0 : index
    %165 = vector.load %arg17[%c0_73, %c0_74, %c0_75] : memref<1x16x128xf32, #tpu.memory_space<vmem>>, vector<1x16x128xf32>
    %166 = vector.shape_cast %165 : vector<1x16x128xf32> to vector<16x128xf32>
    %167 = vector.shape_cast %164 : vector<16x128xf32> to vector<1x16x128xf32>
    tpu.vector_store %arg17[%c0_73, %c0_74, %c0_75], %167 {strides = array<i32>} : memref<1x16x128xf32, #tpu.memory_space<vmem>>, vector<1x16x128xf32>,
    return
  }
  func.func @transform_0(%arg0: i32) -> (i32, i32, i32) {
    %c0_i32 = arith.constant 0 : i32
    %c0_i32_0 = arith.constant 0 : i32
    %c0_i32_1 = arith.constant 0 : i32
    return %arg0, %c0_i32, %c0_i32_0 : i32, i32, i32
  }
  func.func @transform_1(%arg0: i32) -> (i32, i32, i32) {
    %c0_i32 = arith.constant 0 : i32
    %c0_i32_0 = arith.constant 0 : i32
    %c0_i32_1 = arith.constant 0 : i32
    return %arg0, %c0_i32, %c0_i32_0 : i32, i32, i32
  }
  func.func @transform_2(%arg0: i32) -> (i32, i32) {
    %c0_i32 = arith.constant 0 : i32
    %c0_i32_0 = arith.constant 0 : i32
    %c0_i32_1 = arith.constant 0 : i32
    return %c0_i32, %c0_i32_0 : i32, i32
  }
  func.func @transform_3(%arg0: i32) -> (i32, i32) {
    %c0_i32 = arith.constant 0 : i32
    %c0_i32_0 = arith.constant 0 : i32
    %c0_i32_1 = arith.constant 0 : i32
    return %c0_i32, %c0_i32_0 : i32, i32
  }
  func.func @transform_4(%arg0: i32) -> (i32, i32) {
    %c0_i32 = arith.constant 0 : i32
    %c0_i32_0 = arith.constant 0 : i32
    %c0_i32_1 = arith.constant 0 : i32
    return %c0_i32, %c0_i32_0 : i32, i32
  }
  func.func @transform_5(%arg0: i32) -> (i32, i32) {
    %c0_i32 = arith.constant 0 : i32
    %c0_i32_0 = arith.constant 0 : i32
    %c0_i32_1 = arith.constant 0 : i32
    return %c0_i32, %c0_i32_0 : i32, i32
  }
  func.func @transform_6(%arg0: i32) -> (i32, i32) {
    %c0_i32 = arith.constant 0 : i32
    %c0_i32_0 = arith.constant 0 : i32
    %c0_i32_1 = arith.constant 0 : i32
    return %c0_i32, %c0_i32_0 : i32, i32
  }
  func.func @transform_7(%arg0: i32) -> (i32, i32) {
    %c0_i32 = arith.constant 0 : i32
    %c0_i32_0 = arith.constant 0 : i32
    %c0_i32_1 = arith.constant 0 : i32
    return %c0_i32, %c0_i32_0 : i32, i32
  }
  func.func @transform_8(%arg0: i32) -> (i32, i32) {
    %c0_i32 = arith.constant 0 : i32
    %c0_i32_0 = arith.constant 0 : i32
    %c0_i32_1 = arith.constant 0 : i32
    return %c0_i32, %c0_i32_0 : i32, i32
  }
  func.func @transform_9(%arg0: i32) -> (i32, i32) {
    %c0_i32 = arith.constant 0 : i32
    %c0_i32_0 = arith.constant 0 : i32
    %c0_i32_1 = arith.constant 0 : i32
    return %c0_i32, %c0_i32_0 : i32, i32
  }
  func.func @transform_10(%arg0: i32) -> (i32, i32) {
    %c0_i32 = arith.constant 0 : i32
    %c0_i32_0 = arith.constant 0 : i32
    %c0_i32_1 = arith.constant 0 : i32
    return %c0_i32, %c0_i32_0 : i32, i32
  }
  func.func @transform_11(%arg0: i32) -> (i32, i32) {
    %c0_i32 = arith.constant 0 : i32
    %c0_i32_0 = arith.constant 0 : i32
    %c0_i32_1 = arith.constant 0 : i32
    return %c0_i32, %c0_i32_0 : i32, i32
  }
  func.func @transform_12(%arg0: i32) -> (i32, i32) {
    %c0_i32 = arith.constant 0 : i32
    %c0_i32_0 = arith.constant 0 : i32
    %c0_i32_1 = arith.constant 0 : i32
    return %c0_i32, %c0_i32_0 : i32, i32
  }
  func.func @transform_13(%arg0: i32) -> (i32, i32) {
    %c0_i32 = arith.constant 0 : i32
    %c0_i32_0 = arith.constant 0 : i32
    %c0_i32_1 = arith.constant 0 : i32
    return %c0_i32, %c0_i32_0 : i32, i32
  }
  func.func @transform_14(%arg0: i32) -> (i32, i32) {
    %c0_i32 = arith.constant 0 : i32
    %c0_i32_0 = arith.constant 0 : i32
    %c0_i32_1 = arith.constant 0 : i32
    return %c0_i32, %c0_i32_0 : i32, i32
  }
  func.func @transform_15(%arg0: i32) -> (i32, i32) {
    %c0_i32 = arith.constant 0 : i32
    %c0_i32_0 = arith.constant 0 : i32
    %c0_i32_1 = arith.constant 0 : i32
    return %c0_i32, %c0_i32_0 : i32, i32
  }
  func.func @transform_16(%arg0: i32) -> (i32, i32, i32) {
    %c0_i32 = arith.constant 0 : i32
    %c0_i32_0 = arith.constant 0 : i32
    %c0_i32_1 = arith.constant 0 : i32
    return %arg0, %c0_i32, %c0_i32_0 : i32, i32, i32
  }
}

</mosaic_0001>

<llo_original>
// kernel: tpu_custom_call.1
$region0: #{tpu_custom_call.1}
  #allocation0 [shape = 'u32[]', space=smem, size = 0x4, offset = 0x4, fixed_abs, tag = 'smem constant byte address 0x4 - core index']
  #allocation1 [shape = 'u32[144,128]{1,0:T(1,128)}', space=vmem, size = 0x12000, scoped, tag = 'internal scratch']
  #allocation2 [shape = 'bf16[16,128]{1,0:T(16,128)(2,1)}', space=vmem, size = 0x1000, scoped, tag = 'scratch operand']
  %s0 = inlined_call_operand.hbm [shape: f32[2,16,128], index: 0, kind: input, shape index: {}]
  %s1 = inlined_call_operand.hbm [shape: f32[2,16,128], index: 1, kind: input, shape index: {}]
  %s2 = inlined_call_operand.vmem [shape: f32[1,128], index: 2, kind: input, shape index: {}]
  %s3 = inlined_call_operand.vmem [shape: f32[1,128], index: 3, kind: input, shape index: {}]
  %s4 = inlined_call_operand.hbm [shape: bf16[128,256], index: 4, kind: input, shape index: {}]
  %s5 = inlined_call_operand.vmem [shape: f32[1,256], index: 5, kind: input, shape index: {}]
  %s6 = inlined_call_operand.hbm [shape: bf16[128,128], index: 6, kind: input, shape index: {}]
  %s7 = inlined_call_operand.vmem [shape: f32[1,128], index: 7, kind: input, shape index: {}]
  %s8 = inlined_call_operand.hbm [shape: bf16[128,128], index: 8, kind: input, shape index: {}]
  %s9 = inlined_call_operand.vmem [shape: f32[1,128], index: 9, kind: input, shape index: {}]
  %s10 = inlined_call_operand.vmem [shape: f32[1,128], index: 10, kind: input, shape index: {}]
  %s11 = inlined_call_operand.vmem [shape: f32[1,128], index: 11, kind: input, shape index: {}]
  %s12 = inlined_call_operand.hbm [shape: bf16[128,256], index: 12, kind: input, shape index: {}]
  %s13 = inlined_call_operand.vmem [shape: f32[1,256], index: 13, kind: input, shape index: {}]
  %s14 = inlined_call_operand.hbm [shape: bf16[256,128], index: 14, kind: input, shape index: {}]
  %s15 = inlined_call_operand.vmem [shape: f32[1,128], index: 15, kind: input, shape index: {}]
  %s16 = inlined_call_operand.hbm [shape: f32[2,16,128], index: 16, kind: output, shape index: {}]
  %s17 = sld [smem:[#allocation0]]
  $region125: #{tpu_custom_call.1} parent=0
    _
  %s19 = ssub.s32 1, %s17
  %s20 = scalar_select 0, %s19, %s17
  $region1: #{tpu_custom_call.1} parent=0
    #allocation3 [shape = 'u8[16384]{0}', space=vmem, size = 0x4000, scoped, tag = 'input window, operand 0']
    #allocation4 [shape = 's32[2]{0}', space=sflag, size = 0x8, scoped, tag = 'scoped memory for tpu_custom_call.1']
    #allocation5 [shape = 's32[2]{0}', space=sflag, size = 0x8, scoped, tag = 'scoped memory for tpu_custom_call.1']
    #allocation6 [shape = 'u8[16384]{0}', space=vmem, size = 0x4000, scoped, tag = 'input window, operand 1']
    #allocation7 [shape = 's32[2]{0}', space=sflag, size = 0x8, scoped, tag = 'scoped memory for tpu_custom_call.1']
    #allocation8 [shape = 'u8[65536]{0}', space=vmem, size = 0x10000, scoped, tag = 'input window, operand 4, single buffered']
    #allocation9 [shape = 'u8[32768]{0}', space=vmem, size = 0x8000, scoped, tag = 'input window, operand 6, single buffered']
    #allocation10 [shape = 's32[1]{0}', space=sflag, size = 0x4, scoped, tag = 'scoped memory for tpu_custom_call.1']
    #allocation11 [shape = 'u8[32768]{0}', space=vmem, size = 0x8000, scoped, tag = 'input window, operand 8, single buffered']
    #allocation12 [shape = 'u8[65536]{0}', space=vmem, size = 0x10000, scoped, tag = 'input window, operand 12, single buffered']
    #allocation13 [shape = 's32[1]{0}', space=sflag, size = 0x4, scoped, tag = 'scoped memory for tpu_custom_call.1']
    #allocation14 [shape = 'u8[65536]{0}', space=vmem, size = 0x10000, scoped, tag = 'input window, operand 14, single buffered']
    #allocation15 [shape = 'u8[16384]{0}', space=vmem, size = 0x4000, scoped, tag = 'output window, operand 0']
    %21 = vsyncpa [#allocation4], 0
    %s22 = scalar_lea.sflag [#allocation4], 1
    %23 = vsyncpa %s22, 0
    %24 = vsyncpa [#allocation7], 0
    %s25 = scalar_lea.sflag [#allocation7], 1
    %26 = vsyncpa %s25, 0
    %27 = vsyncpa [#allocation10], 0
    %28 = vsyncpa [#allocation13], 0
    %29 = vsyncpa [#allocation5], 0
    %s30 = scalar_lea.sflag [#allocation5], 1
    %31 = vsyncpa %s30, 0
    loop: start=0, step=1, limit=4
    $region2: #{tpu_custom_call.1} parent=1 // loop_pre_header
      _
    $region3: #{tpu_custom_call.1} parent=1 // loop_header
      %s33 = sphi 0, %s37
      %p34 = scmp.ge.s32.totalorder %s33, 4
      %s43 = sphi 0, %s45
      %s46 = sphi 0, %s43
      %s47 = sphi 0, %s46
      %s63 = sphi 0, %s47
      %s69 = sphi 0, %s71
      %s72 = sphi 0, %s69
      %s73 = sphi 0, %s72
      %s89 = sphi 0, %s73
      %s93 = sphi 0, %s93
      %s95 = sphi 0, %s93
      %s96 = sphi 0, %s95
      %s110 = sphi 0, %s96
      %s114 = sphi 0, %s114
      %s116 = sphi 0, %s114
      %s117 = sphi 0, %s116
      %s131 = sphi 0, %s117
      %s135 = sphi 0, %s135
      %s137 = sphi 0, %s135
      %s138 = sphi 0, %s137
      %s152 = sphi 0, %s138
      %s156 = sphi 0, %s156
      %s158 = sphi 0, %s156
      %s159 = sphi 0, %s158
      %s173 = sphi 0, %s159
      %s177 = sphi 0, %s177
      %s179 = sphi 0, %s177
      %s180 = sphi 0, %s179
      %s194 = sphi 0, %s180
      %s198 = sphi 0, %s198
      %s200 = sphi 0, %s198
      %s201 = sphi 0, %s200
      %s215 = sphi 0, %s201
      %s219 = sphi 0, %s219
      %s221 = sphi 0, %s219
      %s222 = sphi 0, %s221
      %s236 = sphi 0, %s222
      %s240 = sphi 0, %s240
      %s242 = sphi 0, %s240
      %s243 = sphi 0, %s242
      %s257 = sphi 0, %s243
      %s261 = sphi 0, %s261
      %s263 = sphi 0, %s261
      %s264 = sphi 0, %s263
      %s278 = sphi 0, %s264
      %s282 = sphi 0, %s282
      %s284 = sphi 0, %s282
      %s285 = sphi 0, %s284
      %s299 = sphi 0, %s285
      %s303 = sphi 0, %s303
      %s305 = sphi 0, %s303
      %s306 = sphi 0, %s305
      %s320 = sphi 0, %s306
      %s324 = sphi 0, %s324
      %s326 = sphi 0, %s324
      %s327 = sphi 0, %s326
      %s341 = sphi 0, %s327
      %s345 = sphi 0, %s345
      %s347 = sphi 0, %s345
      %s348 = sphi 0, %s347
      %s362 = sphi 0, %s348
      %s366 = sphi 0, %s366
      %s368 = sphi 0, %s366
      %s369 = sphi 0, %s368
      %s383 = sphi 0, %s369
      %s389 = sphi 0, %s391
      %s392 = sphi 0, %s389
      %s393 = sphi 0, %s392
      %s409 = sphi 0, %s393
    $region4: #{tpu_custom_call.1} parent=1 // loop_header_branch
      %36 = sbr.rel (%p34) target = $region8
    $region5: #{tpu_custom_call.1} parent=1 // loop_body
      %s38 = ssub.s32 %s33, 1
      %s39 = ssub.s32 %s33, 2
      %s40 = sadd.s32 %s33, 1
      %s41 = ssub.s32 %s33, %s40
      %p42 = scmp.eq.s32.totalorder %s41, 0
      %s44 = sadd.s32 %s43, 1
      %s45 = scalar_select %p42, %s43, %s44
      %p48 = pneg %p42
      %p49 = scmp.eq.s32.totalorder %s33, 1
      %p50 = por %p48, %p49
      %p51 = scmp.ne.s32.totalorder %s43, %s46
      %p52 = scmp.eq.s32.totalorder %s33, 0
      %p53 = por %p51, %p52
      %p54 = scmp.ne.s32.totalorder %s43, %s46
      %p55 = scmp.eq.s32.totalorder %s38, 1
      %p56 = por %p54, %p55
      %p57 = scmp.ne.s32.totalorder %s46, %s47
      %p58 = scmp.eq.s32.totalorder %s38, 0
      %p59 = por %p57, %p58
      %p60 = scmp.ne.s32.totalorder %s46, %s47
      %p61 = scmp.eq.s32.totalorder %s39, 1
      %p62 = por %p60, %p61
      %p64 = scmp.ne.s32.totalorder %s47, %s63
      %p65 = scmp.eq.s32.totalorder %s39, 0
      %p66 = por %p64, %p65
      %s67 = ssub.s32 %s33, %s40
      %p68 = scmp.eq.s32.totalorder %s67, 0
      %s70 = sadd.s32 %s69, 1
      %s71 = scalar_select %p68, %s69, %s70
      %p74 = pneg %p68
      %p75 = scmp.eq.s32.totalorder %s33, 1
      %p76 = por %p74, %p75
      %p77 = scmp.ne.s32.totalorder %s69, %s72
      %p78 = scmp.eq.s32.totalorder %s33, 0
      %p79 = por %p77, %p78
      %p80 = scmp.ne.s32.totalorder %s69, %s72
      %p81 = scmp.eq.s32.totalorder %s38, 1
      %p82 = por %p80, %p81
      %p83 = scmp.ne.s32.totalorder %s72, %s73
      %p84 = scmp.eq.s32.totalorder %s38, 0
      %p85 = por %p83, %p84
      %p86 = scmp.ne.s32.totalorder %s72, %s73
      %p87 = scmp.eq.s32.totalorder %s39, 1
      %p88 = por %p86, %p87
      %p90 = scmp.ne.s32.totalorder %s73, %s89
      %p91 = scmp.eq.s32.totalorder %s39, 0
      %p92 = por %p90, %p91
      %s94 = sadd.s32 %s93, 1
      %p97 = scmp.eq.s32.totalorder %s33, 1
      %p98 = scmp.ne.s32.totalorder %s93, %s95
      %p99 = scmp.eq.s32.totalorder %s33, 0
      %p100 = por %p98, %p99
      %p101 = scmp.ne.s32.totalorder %s93, %s95
      %p102 = scmp.eq.s32.totalorder %s38, 1
      %p103 = por %p101, %p102
      %p104 = scmp.ne.s32.totalorder %s95, %s96
      %p105 = scmp.eq.s32.totalorder %s38, 0
      %p106 = por %p104, %p105
      %p107 = scmp.ne.s32.totalorder %s95, %s96
      %p108 = scmp.eq.s32.totalorder %s39, 1
      %p109 = por %p107, %p108
      %p111 = scmp.ne.s32.totalorder %s96, %s110
      %p112 = scmp.eq.s32.totalorder %s39, 0
      %p113 = por %p111, %p112
      %s115 = sadd.s32 %s114, 1
      %p118 = scmp.eq.s32.totalorder %s33, 1
      %p119 = scmp.ne.s32.totalorder %s114, %s116
      %p120 = scmp.eq.s32.totalorder %s33, 0
      %p121 = por %p119, %p120
      %p122 = scmp.ne.s32.totalorder %s114, %s116
      %p123 = scmp.eq.s32.totalorder %s38, 1
      %p124 = por %p122, %p123
      %p125 = scmp.ne.s32.totalorder %s116, %s117
      %p126 = scmp.eq.s32.totalorder %s38, 0
      %p127 = por %p125, %p126
      %p128 = scmp.ne.s32.totalorder %s116, %s117
      %p129 = scmp.eq.s32.totalorder %s39, 1
      %p130 = por %p128, %p129
      %p132 = scmp.ne.s32.totalorder %s117, %s131
      %p133 = scmp.eq.s32.totalorder %s39, 0
      %p134 = por %p132, %p133
      %s136 = sadd.s32 %s135, 1
      %p139 = scmp.eq.s32.totalorder %s33, 1
      %p140 = scmp.ne.s32.totalorder %s135, %s137
      %p141 = scmp.eq.s32.totalorder %s33, 0
      %p142 = por %p140, %p141
      %p143 = scmp.ne.s32.totalorder %s135, %s137
      %p144 = scmp.eq.s32.totalorder %s38, 1
      %p145 = por %p143, %p144
      %p146 = scmp.ne.s32.totalorder %s137, %s138
      %p147 = scmp.eq.s32.totalorder %s38, 0
      %p148 = por %p146, %p147
      %p149 = scmp.ne.s32.totalorder %s137, %s138
      %p150 = scmp.eq.s32.totalorder %s39, 1
      %p151 = por %p149, %p150
      %p153 = scmp.ne.s32.totalorder %s138, %s152
      %p154 = scmp.eq.s32.totalorder %s39, 0
      %p155 = por %p153, %p154
      %s157 = sadd.s32 %s156, 1
      %p160 = scmp.eq.s32.totalorder %s33, 1
      %p161 = scmp.ne.s32.totalorder %s156, %s158
      %p162 = scmp.eq.s32.totalorder %s33, 0
      %p163 = por %p161, %p162
      %p164 = scmp.ne.s32.totalorder %s156, %s158
      %p165 = scmp.eq.s32.totalorder %s38, 1
      %p166 = por %p164, %p165
      %p167 = scmp.ne.s32.totalorder %s158, %s159
      %p168 = scmp.eq.s32.totalorder %s38, 0
      %p169 = por %p167, %p168
      %p170 = scmp.ne.s32.totalorder %s158, %s159
      %p171 = scmp.eq.s32.totalorder %s39, 1
      %p172 = por %p170, %p171
      %p174 = scmp.ne.s32.totalorder %s159, %s173
      %p175 = scmp.eq.s32.totalorder %s39, 0
      %p176 = por %p174, %p175
      %s178 = sadd.s32 %s177, 1
      %p181 = scmp.eq.s32.totalorder %s33, 1
      %p182 = scmp.ne.s32.totalorder %s177, %s179
      %p183 = scmp.eq.s32.totalorder %s33, 0
      %p184 = por %p182, %p183
      %p185 = scmp.ne.s32.totalorder %s177, %s179
      %p186 = scmp.eq.s32.totalorder %s38, 1
      %p187 = por %p185, %p186
      %p188 = scmp.ne.s32.totalorder %s179, %s180
      %p189 = scmp.eq.s32.totalorder %s38, 0
      %p190 = por %p188, %p189
      %p191 = scmp.ne.s32.totalorder %s179, %s180
      %p192 = scmp.eq.s32.totalorder %s39, 1
      %p193 = por %p191, %p192
      %p195 = scmp.ne.s32.totalorder %s180, %s194
      %p196 = scmp.eq.s32.totalorder %s39, 0
      %p197 = por %p195, %p196
      %s199 = sadd.s32 %s198, 1
      %p202 = scmp.eq.s32.totalorder %s33, 1
      %p203 = scmp.ne.s32.totalorder %s198, %s200
      %p204 = scmp.eq.s32.totalorder %s33, 0
      %p205 = por %p203, %p204
      %p206 = scmp.ne.s32.totalorder %s198, %s200
      %p207 = scmp.eq.s32.totalorder %s38, 1
      %p208 = por %p206, %p207
      %p209 = scmp.ne.s32.totalorder %s200, %s201
      %p210 = scmp.eq.s32.totalorder %s38, 0
      %p211 = por %p209, %p210
      %p212 = scmp.ne.s32.totalorder %s200, %s201
      %p213 = scmp.eq.s32.totalorder %s39, 1
      %p214 = por %p212, %p213
      %p216 = scmp.ne.s32.totalorder %s201, %s215
      %p217 = scmp.eq.s32.totalorder %s39, 0
      %p218 = por %p216, %p217
      %s220 = sadd.s32 %s219, 1
      %p223 = scmp.eq.s32.totalorder %s33, 1
      %p224 = scmp.ne.s32.totalorder %s219, %s221
      %p225 = scmp.eq.s32.totalorder %s33, 0
      %p226 = por %p224, %p225
      %p227 = scmp.ne.s32.totalorder %s219, %s221
      %p228 = scmp.eq.s32.totalorder %s38, 1
      %p229 = por %p227, %p228
      %p230 = scmp.ne.s32.totalorder %s221, %s222
      %p231 = scmp.eq.s32.totalorder %s38, 0
      %p232 = por %p230, %p231
      %p233 = scmp.ne.s32.totalorder %s221, %s222
      %p234 = scmp.eq.s32.totalorder %s39, 1
      %p235 = por %p233, %p234
      %p237 = scmp.ne.s32.totalorder %s222, %s236
      %p238 = scmp.eq.s32.totalorder %s39, 0
      %p239 = por %p237, %p238
      %s241 = sadd.s32 %s240, 1
      %p244 = scmp.eq.s32.totalorder %s33, 1
      %p245 = scmp.ne.s32.totalorder %s240, %s242
      %p246 = scmp.eq.s32.totalorder %s33, 0
      %p247 = por %p245, %p246
      %p248 = scmp.ne.s32.totalorder %s240, %s242
      %p249 = scmp.eq.s32.totalorder %s38, 1
      %p250 = por %p248, %p249
      %p251 = scmp.ne.s32.totalorder %s242, %s243
      %p252 = scmp.eq.s32.totalorder %s38, 0
      %p253 = por %p251, %p252
      %p254 = scmp.ne.s32.totalorder %s242, %s243
      %p255 = scmp.eq.s32.totalorder %s39, 1
      %p256 = por %p254, %p255
      %p258 = scmp.ne.s32.totalorder %s243, %s257
      %p259 = scmp.eq.s32.totalorder %s39, 0
      %p260 = por %p258, %p259
      %s262 = sadd.s32 %s261, 1
      %p265 = scmp.eq.s32.totalorder %s33, 1
      %p266 = scmp.ne.s32.totalorder %s261, %s263
      %p267 = scmp.eq.s32.totalorder %s33, 0
      %p268 = por %p266, %p267
      %p269 = scmp.ne.s32.totalorder %s261, %s263
      %p270 = scmp.eq.s32.totalorder %s38, 1
      %p271 = por %p269, %p270
      %p272 = scmp.ne.s32.totalorder %s263, %s264
      %p273 = scmp.eq.s32.totalorder %s38, 0
      %p274 = por %p272, %p273
      %p275 = scmp.ne.s32.totalorder %s263, %s264
      %p276 = scmp.eq.s32.totalorder %s39, 1
      %p277 = por %p275, %p276
      %p279 = scmp.ne.s32.totalorder %s264, %s278
      %p280 = scmp.eq.s32.totalorder %s39, 0
      %p281 = por %p279, %p280
      %s283 = sadd.s32 %s282, 1
      %p286 = scmp.eq.s32.totalorder %s33, 1
      %p287 = scmp.ne.s32.totalorder %s282, %s284
      %p288 = scmp.eq.s32.totalorder %s33, 0
      %p289 = por %p287, %p288
      %p290 = scmp.ne.s32.totalorder %s282, %s284
      %p291 = scmp.eq.s32.totalorder %s38, 1
      %p292 = por %p290, %p291
      %p293 = scmp.ne.s32.totalorder %s284, %s285
      %p294 = scmp.eq.s32.totalorder %s38, 0
      %p295 = por %p293, %p294
      %p296 = scmp.ne.s32.totalorder %s284, %s285
      %p297 = scmp.eq.s32.totalorder %s39, 1
      %p298 = por %p296, %p297
      %p300 = scmp.ne.s32.totalorder %s285, %s299
      %p301 = scmp.eq.s32.totalorder %s39, 0
      %p302 = por %p300, %p301
      %s304 = sadd.s32 %s303, 1
      %p307 = scmp.eq.s32.totalorder %s33, 1
      %p308 = scmp.ne.s32.totalorder %s303, %s305
      %p309 = scmp.eq.s32.totalorder %s33, 0
      %p310 = por %p308, %p309
      %p311 = scmp.ne.s32.totalorder %s303, %s305
      %p312 = scmp.eq.s32.totalorder %s38, 1
      %p313 = por %p311, %p312
      %p314 = scmp.ne.s32.totalorder %s305, %s306
      %p315 = scmp.eq.s32.totalorder %s38, 0
      %p316 = por %p314, %p315
      %p317 = scmp.ne.s32.totalorder %s305, %s306
      %p318 = scmp.eq.s32.totalorder %s39, 1
      %p319 = por %p317, %p318
      %p321 = scmp.ne.s32.totalorder %s306, %s320
      %p322 = scmp.eq.s32.totalorder %s39, 0
      %p323 = por %p321, %p322
      %s325 = sadd.s32 %s324, 1
      %p328 = scmp.eq.s32.totalorder %s33, 1
      %p329 = scmp.ne.s32.totalorder %s324, %s326
      %p330 = scmp.eq.s32.totalorder %s33, 0
      %p331 = por %p329, %p330
      %p332 = scmp.ne.s32.totalorder %s324, %s326
      %p333 = scmp.eq.s32.totalorder %s38, 1
      %p334 = por %p332, %p333
      %p335 = scmp.ne.s32.totalorder %s326, %s327
      %p336 = scmp.eq.s32.totalorder %s38, 0
      %p337 = por %p335, %p336
      %p338 = scmp.ne.s32.totalorder %s326, %s327
      %p339 = scmp.eq.s32.totalorder %s39, 1
      %p340 = por %p338, %p339
      %p342 = scmp.ne.s32.totalorder %s327, %s341
      %p343 = scmp.eq.s32.totalorder %s39, 0
      %p344 = por %p342, %p343
      %s346 = sadd.s32 %s345, 1
      %p349 = scmp.eq.s32.totalorder %s33, 1
      %p350 = scmp.ne.s32.totalorder %s345, %s347
      %p351 = scmp.eq.s32.totalorder %s33, 0
      %p352 = por %p350, %p351
      %p353 = scmp.ne.s32.totalorder %s345, %s347
      %p354 = scmp.eq.s32.totalorder %s38, 1
      %p355 = por %p353, %p354
      %p356 = scmp.ne.s32.totalorder %s347, %s348
      %p357 = scmp.eq.s32.totalorder %s38, 0
      %p358 = por %p356, %p357
      %p359 = scmp.ne.s32.totalorder %s347, %s348
      %p360 = scmp.eq.s32.totalorder %s39, 1
      %p361 = por %p359, %p360
      %p363 = scmp.ne.s32.totalorder %s348, %s362
      %p364 = scmp.eq.s32.totalorder %s39, 0
      %p365 = por %p363, %p364
      %s367 = sadd.s32 %s366, 1
      %p370 = scmp.eq.s32.totalorder %s33, 1
      %p371 = scmp.ne.s32.totalorder %s366, %s368
      %p372 = scmp.eq.s32.totalorder %s33, 0
      %p373 = por %p371, %p372
      %p374 = scmp.ne.s32.totalorder %s366, %s368
      %p375 = scmp.eq.s32.totalorder %s38, 1
      %p376 = por %p374, %p375
      %p377 = scmp.ne.s32.totalorder %s368, %s369
      %p378 = scmp.eq.s32.totalorder %s38, 0
      %p379 = por %p377, %p378
      %p380 = scmp.ne.s32.totalorder %s368, %s369
      %p381 = scmp.eq.s32.totalorder %s39, 1
      %p382 = por %p380, %p381
      %p384 = scmp.ne.s32.totalorder %s369, %s383
      %p385 = scmp.eq.s32.totalorder %s39, 0
      %p386 = por %p384, %p385
      %s387 = ssub.s32 %s33, %s40
      %p388 = scmp.eq.s32.totalorder %s387, 0
      %s390 = sadd.s32 %s389, 1
      %s391 = scalar_select %p388, %s389, %s390
      %p394 = pneg %p388
      %p395 = scmp.eq.s32.totalorder %s33, 1
      %p396 = por %p394, %p395
      %p397 = scmp.ne.s32.totalorder %s389, %s392
      %p398 = scmp.eq.s32.totalorder %s33, 0
      %p399 = por %p397, %p398
      %p400 = scmp.ne.s32.totalorder %s389, %s392
      %p401 = scmp.eq.s32.totalorder %s38, 1
      %p402 = por %p400, %p401
      %p403 = scmp.ne.s32.totalorder %s392, %s393
      %p404 = scmp.eq.s32.totalorder %s38, 0
      %p405 = por %p403, %p404
      %p406 = scmp.ne.s32.totalorder %s392, %s393
      %p407 = scmp.eq.s32.totalorder %s39, 1
      %p408 = por %p406, %p407
      %p410 = scmp.ne.s32.totalorder %s393, %s409
      %p411 = scmp.eq.s32.totalorder %s39, 0
      %p412 = por %p410, %p411
      %p413 = scmp.le.s32.totalorder 1, %s33
      %p414 = scmp.lt.s32.totalorder %s33, 3
      %p415 = pnand %p413, %p414
      %p416 = pneg %p415
      // Predicated region
      $region9: #{tpu_custom_call.1} parent=5 // pred_check
        _
      $region10: #{tpu_custom_call.1} parent=5 // pred_check_branch
        %418 = sbr.rel (%p415) target = $region12
      $region11: #{tpu_custom_call.1} parent=5 // pred_region
        %s419 = ssub.s32 %s33, 1
        // Predicated region
        $region13: #{tpu_custom_call.1} parent=11 // pred_check
          %p420 = pneg %p106
        $region14: #{tpu_custom_call.1} parent=11 // pred_check_branch
          %422 = sbr.rel (%p420) target = $region16
        $region15: #{tpu_custom_call.1} parent=11 // pred_region
          _
        $region16: #{tpu_custom_call.1} parent=11 // pred_fallthru
          _
        // Predicated region
        $region17: #{tpu_custom_call.1} parent=11 // pred_check
          %p423 = pneg %p127
        $region18: #{tpu_custom_call.1} parent=11 // pred_check_branch
          %425 = sbr.rel (%p423) target = $region20
        $region19: #{tpu_custom_call.1} parent=11 // pred_region
          _
        $region20: #{tpu_custom_call.1} parent=11 // pred_fallthru
          _
        // Predicated region
        $region21: #{tpu_custom_call.1} parent=11 // pred_check
          %p426 = pneg %p148
        $region22: #{tpu_custom_call.1} parent=11 // pred_check_branch
          %428 = sbr.rel (%p426) target = $region24
        $region23: #{tpu_custom_call.1} parent=11 // pred_region
          %s430 = ssub.s32 2048, 2048
          %431 = vsyncadd [#allocation7], %s430
          %s432 = sshll.u32 [#allocation8], 4
          %s433 = int_to_ptr.vmem [resolvable:$true] %s432
          %438 = dma.hbm_to_vmem [thread:$0]  %s4, 2048, %s433, [#allocation7], 128, 128, 8
        $region24: #{tpu_custom_call.1} parent=11 // pred_fallthru
          _
        // Predicated region
        $region25: #{tpu_custom_call.1} parent=11 // pred_check
          %p439 = pneg %p169
        $region26: #{tpu_custom_call.1} parent=11 // pred_check_branch
          %441 = sbr.rel (%p439) target = $region28
        $region27: #{tpu_custom_call.1} parent=11 // pred_region
          _
        $region28: #{tpu_custom_call.1} parent=11 // pred_fallthru
          _
        // Predicated region
        $region29: #{tpu_custom_call.1} parent=11 // pred_check
          %p442 = pneg %p190
        $region30: #{tpu_custom_call.1} parent=11 // pred_check_branch
          %444 = sbr.rel (%p442) target = $region32
        $region31: #{tpu_custom_call.1} parent=11 // pred_region
          %s446 = ssub.s32 1024, 1024
          %447 = vsyncadd [#allocation10], %s446
          %s448 = sshll.u32 [#allocation9], 4
          %s449 = int_to_ptr.vmem [resolvable:$true] %s448
          %454 = dma.hbm_to_vmem [thread:$0]  %s6, 1024, %s449, [#allocation10], 64, 64, 4
        $region32: #{tpu_custom_call.1} parent=11 // pred_fallthru
          _
        // Predicated region
        $region33: #{tpu_custom_call.1} parent=11 // pred_check
          %p455 = pneg %p211
        $region34: #{tpu_custom_call.1} parent=11 // pred_check_branch
          %457 = sbr.rel (%p455) target = $region36
        $region35: #{tpu_custom_call.1} parent=11 // pred_region
          _
        $region36: #{tpu_custom_call.1} parent=11 // pred_fallthru
          _
        // Predicated region
        $region37: #{tpu_custom_call.1} parent=11 // pred_check
          %p458 = pneg %p232
        $region38: #{tpu_custom_call.1} parent=11 // pred_check_branch
          %460 = sbr.rel (%p458) target = $region40
        $region39: #{tpu_custom_call.1} parent=11 // pred_region
          %s462 = ssub.s32 1024, 1024
          %463 = vsyncadd [#allocation10], %s462
          %s464 = sshll.u32 [#allocation11], 4
          %s465 = int_to_ptr.vmem [resolvable:$true] %s464
          %470 = dma.hbm_to_vmem [thread:$0]  %s8, 1024, %s465, [#allocation10], 64, 64, 4
        $region40: #{tpu_custom_call.1} parent=11 // pred_fallthru
          _
        // Predicated region
        $region41: #{tpu_custom_call.1} parent=11 // pred_check
          %p471 = pneg %p253
        $region42: #{tpu_custom_call.1} parent=11 // pred_check_branch
          %473 = sbr.rel (%p471) target = $region44
        $region43: #{tpu_custom_call.1} parent=11 // pred_region
          _
        $region44: #{tpu_custom_call.1} parent=11 // pred_fallthru
          _
        // Predicated region
        $region45: #{tpu_custom_call.1} parent=11 // pred_check
          %p474 = pneg %p274
        $region46: #{tpu_custom_call.1} parent=11 // pred_check_branch
          %476 = sbr.rel (%p474) target = $region48
        $region47: #{tpu_custom_call.1} parent=11 // pred_region
          _
        $region48: #{tpu_custom_call.1} parent=11 // pred_fallthru
          _
        // Predicated region
        $region49: #{tpu_custom_call.1} parent=11 // pred_check
          %p477 = pneg %p295
        $region50: #{tpu_custom_call.1} parent=11 // pred_check_branch
          %479 = sbr.rel (%p477) target = $region52
        $region51: #{tpu_custom_call.1} parent=11 // pred_region
          _
        $region52: #{tpu_custom_call.1} parent=11 // pred_fallthru
          _
        // Predicated region
        $region53: #{tpu_custom_call.1} parent=11 // pred_check
          %p480 = pneg %p316
        $region54: #{tpu_custom_call.1} parent=11 // pred_check_branch
          %482 = sbr.rel (%p480) target = $region56
        $region55: #{tpu_custom_call.1} parent=11 // pred_region
          %s484 = ssub.s32 2048, 2048
          %485 = vsyncadd [#allocation13], %s484
          %s486 = sshll.u32 [#allocation12], 4
          %s487 = int_to_ptr.vmem [resolvable:$true] %s486
          %492 = dma.hbm_to_vmem [thread:$0]  %s12, 2048, %s487, [#allocation13], 128, 128, 8
        $region56: #{tpu_custom_call.1} parent=11 // pred_fallthru
          _
        // Predicated region
        $region57: #{tpu_custom_call.1} parent=11 // pred_check
          %p493 = pneg %p337
        $region58: #{tpu_custom_call.1} parent=11 // pred_check_branch
          %495 = sbr.rel (%p493) target = $region60
        $region59: #{tpu_custom_call.1} parent=11 // pred_region
          _
        $region60: #{tpu_custom_call.1} parent=11 // pred_fallthru
          _
        // Predicated region
        $region61: #{tpu_custom_call.1} parent=11 // pred_check
          %p496 = pneg %p358
        $region62: #{tpu_custom_call.1} parent=11 // pred_check_branch
          %498 = sbr.rel (%p496) target = $region64
        $region63: #{tpu_custom_call.1} parent=11 // pred_region
          %s500 = ssub.s32 2048, 2048
          %501 = vsyncadd [#allocation13], %s500
          %s502 = sshll.u32 [#allocation14], 4
          %s503 = int_to_ptr.vmem [resolvable:$true] %s502
          %508 = dma.hbm_to_vmem [thread:$0]  %s14, 2048, %s503, [#allocation13], 64, 64, 4
        $region64: #{tpu_custom_call.1} parent=11 // pred_fallthru
          _
        // Predicated region
        $region65: #{tpu_custom_call.1} parent=11 // pred_check
          %p509 = pneg %p379
        $region66: #{tpu_custom_call.1} parent=11 // pred_check_branch
          %511 = sbr.rel (%p509) target = $region68
        $region67: #{tpu_custom_call.1} parent=11 // pred_region
          _
        $region68: #{tpu_custom_call.1} parent=11 // pred_fallthru
          _
      $region12: #{tpu_custom_call.1} parent=5 // pred_fallthru
        _
      %p512 = scmp.lt.s32.totalorder %s33, 2
      // Predicated region
      $region69: #{tpu_custom_call.1} parent=5 // pred_check
        %p513 = pneg %p512
      $region70: #{tpu_custom_call.1} parent=5 // pred_check_branch
        %515 = sbr.rel (%p513) target = $region72
      $region71: #{tpu_custom_call.1} parent=5 // pred_region
        // Predicated region
        $region73: #{tpu_custom_call.1} parent=71 // pred_check
          %p516 = pneg %p53
        $region74: #{tpu_custom_call.1} parent=71 // pred_check_branch
          %518 = sbr.rel (%p516) target = $region76
        $region75: #{tpu_custom_call.1} parent=71 // pred_region
          %s519 = sand.u32 %s43, 1
          %s520 = scalar_lea.sflag [#allocation4], %s519
          %s521 = sand.u32 %s43, 1
          %s522 = smul.addr %s521, 16
          %s523 = scalar_lea.vmem [#allocation3], %s522
          %s525 = ssub.s32 256, 256
          %526 = vsyncadd %s520, %s525
          %s527 = smul.addr %s33, 2
          %s528 = smul.addr %s527, 128
          %s529 = scalar_lea.hbm %s0, %s528
          %s530 = sshll.u32 %s523, 4
          %s531 = int_to_ptr.vmem [resolvable:$true] %s530
          %536 = dma.hbm_to_vmem [thread:$0]  %s529, 256, %s531, %s520, 128, 128, 8
        $region76: #{tpu_custom_call.1} parent=71 // pred_fallthru
          _
        // Predicated region
        $region77: #{tpu_custom_call.1} parent=71 // pred_check
          %p537 = pneg %p79
        $region78: #{tpu_custom_call.1} parent=71 // pred_check_branch
          %539 = sbr.rel (%p537) target = $region80
        $region79: #{tpu_custom_call.1} parent=71 // pred_region
          %s540 = sand.u32 %s33, 1
          %s541 = scalar_lea.sflag [#allocation7], %s540
          %s542 = sand.u32 %s69, 1
          %s543 = smul.addr %s542, 16
          %s544 = scalar_lea.vmem [#allocation6], %s543
          %s546 = ssub.s32 256, 256
          %547 = vsyncadd %s541, %s546
          %s548 = smul.addr %s33, 2
          %s549 = smul.addr %s548, 128
          %s550 = scalar_lea.hbm %s1, %s549
          %s551 = sshll.u32 %s544, 4
          %s552 = int_to_ptr.vmem [resolvable:$true] %s551
          %557 = dma.hbm_to_vmem [thread:$0]  %s550, 256, %s552, %s541, 128, 128, 8
        $region80: #{tpu_custom_call.1} parent=71 // pred_fallthru
          _
      $region72: #{tpu_custom_call.1} parent=5 // pred_fallthru
        _
      %p558 = scmp.le.s32.totalorder 1, %s33
      %p559 = scmp.lt.s32.totalorder %s33, 3
      %p560 = pnand %p558, %p559
      %p561 = pneg %p560
      // Predicated region
      $region81: #{tpu_custom_call.1} parent=5 // pred_check
        _
      $region82: #{tpu_custom_call.1} parent=5 // pred_check_branch
        %563 = sbr.rel (%p560) target = $region84
      $region83: #{tpu_custom_call.1} parent=5 // pred_region
        %s564 = ssub.s32 %s33, 1
        %s565 = sand.u32 %s46, 1
        %s566 = scalar_lea.sflag [#allocation4], %s565
        %s567 = sand.u32 %s46, 1
        %s568 = smul.addr %s567, 16
        %s569 = scalar_lea.vmem [#allocation3], %s568
        // Predicated region
        $region85: #{tpu_custom_call.1} parent=83 // pred_check
          %p570 = pneg %p59
        $region86: #{tpu_custom_call.1} parent=83 // pred_check_branch
          %572 = sbr.rel (%p570) target = $region88
        $region87: #{tpu_custom_call.1} parent=83 // pred_region
          %573 = dma.done %s566, 256
        $region88: #{tpu_custom_call.1} parent=83 // pred_fallthru
          _
        %s574 = sand.u32 %s38, 1
        %s575 = scalar_lea.sflag [#allocation7], %s574
        %s576 = sand.u32 %s72, 1
        %s577 = smul.addr %s576, 16
        %s578 = scalar_lea.vmem [#allocation6], %s577
        // Predicated region
        $region89: #{tpu_custom_call.1} parent=83 // pred_check
          %p579 = pneg %p85
        $region90: #{tpu_custom_call.1} parent=83 // pred_check_branch
          %581 = sbr.rel (%p579) target = $region92
        $region91: #{tpu_custom_call.1} parent=83 // pred_region
          %582 = dma.done %s575, 256
        $region92: #{tpu_custom_call.1} parent=83 // pred_fallthru
          _
        // Predicated region
        $region93: #{tpu_custom_call.1} parent=83 // pred_check
          %p583 = pneg %p148
        $region94: #{tpu_custom_call.1} parent=83 // pred_check_branch
          %585 = sbr.rel (%p583) target = $region96
        $region95: #{tpu_custom_call.1} parent=83 // pred_region
          %586 = dma.done [#allocation7], 2048
        $region96: #{tpu_custom_call.1} parent=83 // pred_fallthru
          _
        // Predicated region
        $region97: #{tpu_custom_call.1} parent=83 // pred_check
          %p587 = pneg %p190
        $region98: #{tpu_custom_call.1} parent=83 // pred_check_branch
          %589 = sbr.rel (%p587) target = $region100
        $region99: #{tpu_custom_call.1} parent=83 // pred_region
          %590 = dma.done [#allocation10], 1024
        $region100: #{tpu_custom_call.1} parent=83 // pred_fallthru
          _
        // Predicated region
        $region101: #{tpu_custom_call.1} parent=83 // pred_check
          %p591 = pneg %p232
        $region102: #{tpu_custom_call.1} parent=83 // pred_check_branch
          %593 = sbr.rel (%p591) target = $region104
        $region103: #{tpu_custom_call.1} parent=83 // pred_region
          %594 = dma.done [#allocation10], 1024
        $region104: #{tpu_custom_call.1} parent=83 // pred_fallthru
          _
        // Predicated region
        $region105: #{tpu_custom_call.1} parent=83 // pred_check
          %p595 = pneg %p316
        $region106: #{tpu_custom_call.1} parent=83 // pred_check_branch
          %597 = sbr.rel (%p595) target = $region108
        $region107: #{tpu_custom_call.1} parent=83 // pred_region
          %598 = dma.done [#allocation13], 2048
        $region108: #{tpu_custom_call.1} parent=83 // pred_fallthru
          _
        // Predicated region
        $region109: #{tpu_custom_call.1} parent=83 // pred_check
          %p599 = pneg %p358
        $region110: #{tpu_custom_call.1} parent=83 // pred_check_branch
          %601 = sbr.rel (%p599) target = $region112
        $region111: #{tpu_custom_call.1} parent=83 // pred_region
          %602 = dma.done [#allocation13], 2048
        $region112: #{tpu_custom_call.1} parent=83 // pred_fallthru
          _
        %s603 = sand.u32 %s46, 1
        %s604 = scalar_lea.sflag [#allocation4], %s603
        %s605 = sand.u32 %s46, 1
        %s606 = smul.addr %s605, 16
        %s607 = scalar_lea.vmem [#allocation3], %s606
        %p608 = pneg %p59
        %p609 = pneg %p56
        %s610 = sand.u32 %s38, 1
        %s611 = scalar_lea.sflag [#allocation7], %s610
        %s612 = sand.u32 %s72, 1
        %s613 = smul.addr %s612, 16
        %s614 = scalar_lea.vmem [#allocation6], %s613
        %p615 = pneg %p85
        %p616 = pneg %p82
        %p617 = pneg %p106
        %p618 = pneg %p103
        %p619 = pneg %p127
        %p620 = pneg %p124
        %p621 = pneg %p148
        %p622 = pneg %p145
        %p623 = pneg %p169
        %p624 = pneg %p166
        %p625 = pneg %p190
        %p626 = pneg %p187
        %p627 = pneg %p211
        %p628 = pneg %p208
        %p629 = pneg %p232
        %p630 = pneg %p229
        %p631 = pneg %p253
        %p632 = pneg %p250
        %p633 = pneg %p274
        %p634 = pneg %p271
        %p635 = pneg %p295
        %p636 = pneg %p292
        %p637 = pneg %p316
        %p638 = pneg %p313
        %p639 = pneg %p337
        %p640 = pneg %p334
        %p641 = pneg %p358
        %p642 = pneg %p355
        %p643 = pneg %p379
        %p644 = pneg %p376
        %p645 = pneg %p405
        %p646 = pneg %p402
        %s647 = sand.u32 %s392, 1
        %s648 = scalar_lea.sflag [#allocation5], %s647
        %s649 = sand.u32 %s392, 1
        %s650 = smul.addr %s649, 16
        %s651 = scalar_lea.vmem [#allocation15], %s650
        %v653 = vld [vmem:[%s569] sm:$0xff]
        %v654 = vld [vmem:[%s569 + $0x8] sm:$0xff]
        %v655 = vld [vmem:[%s2] sm:$0x1]
        %v656 = vld [vmem:[%s3] sm:$0x1]
        %657 = vadd.xlane.f32.xlu0 %v653
        %v658 = vpop.xlane.xlu0 %657
        %659 = vadd.xlane.f32.xlu0 %v654
        %v660 = vpop.xlane.xlu0 %659
        %v661 = vrcp.pop 128.0
        %v662 = vmul.f32 %v658, %v661
        %v663 = vmul.f32 %v660, %v661
        %v664 = vsub.f32 %v653, %v662
        %v665 = vsub.f32 %v654, %v663
        %v666 = vmul.f32 %v664, %v664
        %v667 = vmul.f32 %v665, %v665
        %668 = vadd.xlane.f32.xlu0 %v666
        %v669 = vpop.xlane.xlu0 %668
        %670 = vadd.xlane.f32.xlu0 %v667
        %v671 = vpop.xlane.xlu0 %670
        %v672 = vmul.f32 %v669, %v661
        %v673 = vmul.f32 %v671, %v661
        %v674 = vadd.f32 %v672, 1e-05
        %v675 = vadd.f32 %v673, 1e-05
        %v676 = vrsqrt.pop %v674
        %v677 = vrsqrt.pop %v675
        %v678 = vmul.f32 %v664, %v676
        %v679 = vmul.f32 %v665, %v677
        %v681 = vlaneseq
        %v682 = vshrl.u32 %v681, 7
        %v683 = vsub.s32 0, %v682
        %v684 = vrot.slane %v655, %v683
        %v686 = vmul.f32 %v678, %v684
        %v687 = vmul.f32 %v679, %v684
        %v689 = vlaneseq
        %v690 = vshrl.u32 %v689, 7
        %v691 = vsub.s32 0, %v690
        %v692 = vrot.slane %v656, %v691
        %v694 = vadd.f32 %v686, %v692
        %v695 = vadd.f32 %v687, %v692
        %v696 = vld [vmem:[%s578] sm:$0xff]
        %v697 = vld [vmem:[%s578 + $0x8] sm:$0xff]
        %v698 = vadd.f32 %v694, %v696
        %v699 = vadd.f32 %v695, %v697
        %v700 = vpack.c.bf16 %v699, %v698
        %v701 = vld [vmem:[#allocation8] sm:$0xff]
        %v702 = vld [vmem:[#allocation8 + $0x8] sm:$0xff]
        %v703 = vld [vmem:[#allocation8 + $0x10] sm:$0xff]
        %v704 = vld [vmem:[#allocation8 + $0x18] sm:$0xff]
        %v705 = vld [vmem:[#allocation8 + $0x20] sm:$0xff]
        %v706 = vld [vmem:[#allocation8 + $0x28] sm:$0xff]
        %v707 = vld [vmem:[#allocation8 + $0x30] sm:$0xff]
        %v708 = vld [vmem:[#allocation8 + $0x38] sm:$0xff]
        %v709 = vld [vmem:[#allocation8 + $0x40] sm:$0xff]
        %v710 = vld [vmem:[#allocation8 + $0x48] sm:$0xff]
        %v711 = vld [vmem:[#allocation8 + $0x50] sm:$0xff]
        %v712 = vld [vmem:[#allocation8 + $0x58] sm:$0xff]
        %v713 = vld [vmem:[#allocation8 + $0x60] sm:$0xff]
        %v714 = vld [vmem:[#allocation8 + $0x68] sm:$0xff]
        %v715 = vld [vmem:[#allocation8 + $0x70] sm:$0xff]
        %v716 = vld [vmem:[#allocation8 + $0x78] sm:$0xff]
        %v717 = vld [vmem:[%s5] sm:$0x3]
        %v719 = vlaneseq
        %v720 = vshrl.u32 %v719, 7
        %v721 = vsub.s32 0, %v720
        %v722 = vrot.slane %v717, %v721
        %v723 = vlaneseq
        %v724 = vshrl.u32 %v723, 7
        %v725 = vsub.s32 1, %v724
        %v726 = vrot.slane %v717, %v725
        %v745 = vunpack.c.l.b16 %v701
        %v746 = vunpack.c.h.b16 %v701
        %v747 = vunpack.c.l.b16 %v702
        %v748 = vunpack.c.h.b16 %v702
        %v749 = vunpack.c.l.b16 %v703
        %v750 = vunpack.c.h.b16 %v703
        %v751 = vunpack.c.l.b16 %v704
        %v752 = vunpack.c.h.b16 %v704
        %v753 = vunpack.c.l.b16 %v705
        %v754 = vunpack.c.h.b16 %v705
        %v755 = vunpack.c.l.b16 %v706
        %v756 = vunpack.c.h.b16 %v706
        %v757 = vunpack.c.l.b16 %v707
        %v758 = vunpack.c.h.b16 %v707
        %v759 = vunpack.c.l.b16 %v708
        %v760 = vunpack.c.h.b16 %v708
        %v761 = vunpack.c.l.b16 %v709
        %v762 = vunpack.c.h.b16 %v709
        %v763 = vunpack.c.l.b16 %v710
        %v764 = vunpack.c.h.b16 %v710
        %v765 = vunpack.c.l.b16 %v711
        %v766 = vunpack.c.h.b16 %v711
        %v767 = vunpack.c.l.b16 %v712
        %v768 = vunpack.c.h.b16 %v712
        %v769 = vunpack.c.l.b16 %v713
        %v770 = vunpack.c.h.b16 %v713
        %v771 = vunpack.c.l.b16 %v714
        %v772 = vunpack.c.h.b16 %v714
        %v773 = vunpack.c.l.b16 %v715
        %v774 = vunpack.c.h.b16 %v715
        %v775 = vunpack.c.l.b16 %v716
        %v776 = vunpack.c.h.b16 %v716
        %v777 = vpack.c.b16 %v747, %v745
        %v778 = vpack.c.b16 %v748, %v746
        %v779 = vpack.c.b16 %v751, %v749
        %v780 = vpack.c.b16 %v752, %v750
        %v781 = vpack.c.b16 %v755, %v753
        %v782 = vpack.c.b16 %v756, %v754
        %v783 = vpack.c.b16 %v759, %v757
        %v784 = vpack.c.b16 %v760, %v758
        %v785 = vpack.c.b16 %v763, %v761
        %v786 = vpack.c.b16 %v764, %v762
        %v787 = vpack.c.b16 %v767, %v765
        %v788 = vpack.c.b16 %v768, %v766
        %v789 = vpack.c.b16 %v771, %v769
        %v790 = vpack.c.b16 %v772, %v770
        %v791 = vpack.c.b16 %v775, %v773
        %v792 = vpack.c.b16 %v776, %v774
        %809 = vmatprep.subr.bf16.mxu0 %v778
        %810 = vmatpush1.bf16.msra.mxu0 %v777
        %811 = vmatprep.subr.bf16.mxu0 %v780
        %812 = vmatpush1.bf16.msra.mxu0 %v779
        %813 = vmatprep.subr.bf16.mxu0 %v782
        %814 = vmatpush1.bf16.msra.mxu0 %v781
        %815 = vmatprep.subr.bf16.mxu0 %v784
        %816 = vmatpush1.bf16.msra.mxu0 %v783
        %817 = vmatprep.subr.bf16.mxu0 %v786
        %818 = vmatpush1.bf16.msra.mxu0 %v785
        %819 = vmatprep.subr.bf16.mxu0 %v788
        %820 = vmatpush1.bf16.msra.mxu0 %v787
        %821 = vmatprep.subr.bf16.mxu0 %v790
        %822 = vmatpush1.bf16.msra.mxu0 %v789
        %823 = vmatprep.subr.bf16.mxu0 %v792
        %824 = vmatpush1.bf16.msra.mxu0 %v791
        %825 = vmatprep.subr.bf16.mxu0 0
        %826 = vmatpush1.bf16.msra.mxu0 0
        %827 = vmatprep.subr.bf16.mxu0 0
        %828 = vmatpush1.bf16.msra.mxu0 0
        %829 = vmatprep.subr.bf16.mxu0 0
        %830 = vmatpush1.bf16.msra.mxu0 0
        %831 = vmatprep.subr.bf16.mxu0 0
        %832 = vmatpush1.bf16.msra.mxu0 0
        %833 = vmatprep.subr.bf16.mxu0 0
        %834 = vmatpush1.bf16.msra.mxu0 0
        %835 = vmatprep.subr.bf16.mxu0 0
        %836 = vmatpush1.bf16.msra.mxu0 0
        %837 = vmatprep.subr.bf16.mxu0 0
        %838 = vmatpush1.bf16.msra.mxu0 0
        %839 = vmatprep.subr.bf16.mxu0 0
        %840 = vmatpush1.bf16.msra.mxu0 0
        %841 = vmatprep.mubr.bf16.mxu0 0
        %842 = vmatmul.mubr.bf16.gmra.mrb[0].mxu0 %v700
        %v843 = vpop.f32.mrb[0].mxu0
        %v844 = vadd.f32 %v722, %v843
        %v845 = vpop.f32.mrb[0].mxu0
        %v846 = vadd.f32 %v726, %v845
        %v847 = vpop.f32.mrb[0].mxu0
        %v848 = vadd.f32 %v722, %v847
        %v849 = vpop.f32.mrb[0].mxu0
        %v850 = vadd.f32 %v726, %v849
        %851 = vdwg.mxu0
        %v852 = vpack.c.bf16 %v695, %v694
        %v853 = vld [vmem:[#allocation9] sm:$0xf]
        %v854 = vld [vmem:[#allocation9 + $0x4] sm:$0xf]
        %v855 = vld [vmem:[#allocation9 + $0x8] sm:$0xf]
        %v856 = vld [vmem:[#allocation9 + $0xc] sm:$0xf]
        %v857 = vld [vmem:[#allocation9 + $0x10] sm:$0xf]
        %v858 = vld [vmem:[#allocation9 + $0x14] sm:$0xf]
        %v859 = vld [vmem:[#allocation9 + $0x18] sm:$0xf]
        %v860 = vld [vmem:[#allocation9 + $0x1c] sm:$0xf]
        %v861 = vld [vmem:[#allocation9 + $0x20] sm:$0xf]
        %v862 = vld [vmem:[#allocation9 + $0x24] sm:$0xf]
        %v863 = vld [vmem:[#allocation9 + $0x28] sm:$0xf]
        %v864 = vld [vmem:[#allocation9 + $0x2c] sm:$0xf]
        %v865 = vld [vmem:[#allocation9 + $0x30] sm:$0xf]
        %v866 = vld [vmem:[#allocation9 + $0x34] sm:$0xf]
        %v867 = vld [vmem:[#allocation9 + $0x38] sm:$0xf]
        %v868 = vld [vmem:[#allocation9 + $0x3c] sm:$0xf]
        %v869 = vld [vmem:[%s7] sm:$0x1]
        %v871 = vlaneseq
        %v872 = vshrl.u32 %v871, 7
        %v873 = vsub.s32 0, %v872
        %v874 = vrot.slane %v869, %v873
        %v892 = vunpack.c.l.b16 %v853
        %v893 = vunpack.c.l.b16 %v854
        %v894 = vunpack.c.l.b16 %v855
        %v895 = vunpack.c.l.b16 %v856
        %v896 = vunpack.c.l.b16 %v857
        %v897 = vunpack.c.l.b16 %v858
        %v898 = vunpack.c.l.b16 %v859
        %v899 = vunpack.c.l.b16 %v860
        %v900 = vunpack.c.l.b16 %v861
        %v901 = vunpack.c.l.b16 %v862
        %v902 = vunpack.c.l.b16 %v863
        %v903 = vunpack.c.l.b16 %v864
        %v904 = vunpack.c.l.b16 %v865
        %v905 = vunpack.c.l.b16 %v866
        %v906 = vunpack.c.l.b16 %v867
        %v907 = vunpack.c.l.b16 %v868
        %v908 = vpack.c.b16 %v893, %v892
        %v909 = vpack.c.b16 %v895, %v894
        %v910 = vpack.c.b16 %v897, %v896
        %v911 = vpack.c.b16 %v899, %v898
        %v912 = vpack.c.b16 %v901, %v900
        %v913 = vpack.c.b16 %v903, %v902
        %v914 = vpack.c.b16 %v905, %v904
        %v915 = vpack.c.b16 %v907, %v906
        %924 = vmatprep.subr.bf16.mxu0 0
        %925 = vmatpush1.bf16.msra.mxu0 %v908
        %926 = vmatprep.subr.bf16.mxu0 0
        %927 = vmatpush1.bf16.msra.mxu0 %v909
        %928 = vmatprep.subr.bf16.mxu0 0
        %929 = vmatpush1.bf16.msra.mxu0 %v910
        %930 = vmatprep.subr.bf16.mxu0 0
        %931 = vmatpush1.bf16.msra.mxu0 %v911
        %932 = vmatprep.subr.bf16.mxu0 0
        %933 = vmatpush1.bf16.msra.mxu0 %v912
        %934 = vmatprep.subr.bf16.mxu0 0
        %935 = vmatpush1.bf16.msra.mxu0 %v913
        %936 = vmatprep.subr.bf16.mxu0 0
        %937 = vmatpush1.bf16.msra.mxu0 %v914
        %938 = vmatprep.subr.bf16.mxu0 0
        %939 = vmatpush1.bf16.msra.mxu0 %v915
        %940 = vmatprep.subr.bf16.mxu0 0
        %941 = vmatpush1.bf16.msra.mxu0 0
        %942 = vmatprep.subr.bf16.mxu0 0
        %943 = vmatpush1.bf16.msra.mxu0 0
        %944 = vmatprep.subr.bf16.mxu0 0
        %945 = vmatpush1.bf16.msra.mxu0 0
        %946 = vmatprep.subr.bf16.mxu0 0
        %947 = vmatpush1.bf16.msra.mxu0 0
        %948 = vmatprep.subr.bf16.mxu0 0
        %949 = vmatpush1.bf16.msra.mxu0 0
        %950 = vmatprep.subr.bf16.mxu0 0
        %951 = vmatpush1.bf16.msra.mxu0 0
        %952 = vmatprep.subr.bf16.mxu0 0
        %953 = vmatpush1.bf16.msra.mxu0 0
        %954 = vmatprep.subr.bf16.mxu0 0
        %955 = vmatpush1.bf16.msra.mxu0 0
        %956 = vmatprep.mubr.bf16.mxu0 0
        %957 = vmatmul.mubr.bf16.gmra.mrb[0].mxu0 %v852
        %v958 = vpop.f32.mrb[0].mxu0
        %v959 = vadd.f32 %v874, %v958
        %v960 = vpop.f32.mrb[0].mxu0
        %v961 = vpop.f32.mrb[0].mxu0
        %v962 = vadd.f32 %v874, %v961
        %v963 = vpop.f32.mrb[0].mxu0
        %964 = vdwg.mxu0
        %v965 = vpack.c.bf16 %v848, %v844
        %v966 = vpack.c.bf16 %v850, %v846
        %v967 = vpack.c.bf16 %v962, %v959
        %vm968 = vcmask 261120
        %v970 = vsel %vm968, %v965, 0
        %v973 = vsel %vm968, %v966, 0
        %975 = vmatprep.subr.bf16.mxu0 0
        %976 = vmatpush1.bf16.xpose.msra.mxu0 %v973
        %977 = vmatprep.subr.bf16.mxu0 0
        %978 = vmatpush1.bf16.xpose.msra.mxu0 0
        %979 = vmatprep.subr.bf16.mxu0 0
        %980 = vmatpush1.bf16.xpose.msra.mxu0 0
        %981 = vmatprep.subr.bf16.mxu0 0
        %982 = vmatpush1.bf16.xpose.msra.mxu0 0
        %983 = vmatprep.subr.bf16.mxu0 0
        %984 = vmatpush1.bf16.xpose.msra.mxu0 0
        %985 = vmatprep.subr.bf16.mxu0 0
        %986 = vmatpush1.bf16.xpose.msra.mxu0 0
        %987 = vmatprep.subr.bf16.mxu0 0
        %988 = vmatpush1.bf16.xpose.msra.mxu0 0
        %989 = vmatprep.subr.bf16.mxu0 0
        %990 = vmatpush1.bf16.xpose.msra.mxu0 0
        %991 = vmatprep.subr.bf16.mxu0 0
        %992 = vmatpush1.bf16.xpose.msra.mxu0 0
        %993 = vmatprep.subr.bf16.mxu0 0
        %994 = vmatpush1.bf16.xpose.msra.mxu0 0
        %995 = vmatprep.subr.bf16.mxu0 0
        %996 = vmatpush1.bf16.xpose.msra.mxu0 0
        %997 = vmatprep.subr.bf16.mxu0 0
        %998 = vmatpush1.bf16.xpose.msra.mxu0 0
        %999 = vmatprep.subr.bf16.mxu0 0
        %1000 = vmatpush1.bf16.xpose.msra.mxu0 0
        %1001 = vmatprep.subr.bf16.mxu0 0
        %1002 = vmatpush1.bf16.xpose.msra.mxu0 0
        %1003 = vmatprep.subr.bf16.mxu0 0
        %1004 = vmatpush1.bf16.xpose.msra.mxu0 0
        %1005 = vmatprep.subr.bf16.mxu0 0
        %1006 = vmatpush1.bf16.xpose.msra.mxu0 0
        %1007 = vmatprep.mubr.bf16.mxu0 0
        %1008 = vmatmul.mubr.bf16.gmra.mrb[0].mxu0 %v970
        %v1009 = vpop.f32.mrb[0].mxu0
        %v1010 = vadd.f32 0.0, %v1009
        %v1011 = vpop.f32.mrb[0].mxu0
        %v1012 = vpop.f32.mrb[0].mxu0
        %v1013 = vadd.f32 0.0, %v1012
        %v1014 = vpop.f32.mrb[0].mxu0
        %1015 = vdwg.mxu0
        %vm1016 = vcmask 130048
        %v1017 = vsel %vm1016, %v1010, -inf
        %1018 = vmax.xlane.f32.xlu0 %v1017
        %v1019 = vpop.xlane.xlu0 %1018
        %v1020 = vsel %vm1016, %v1013, -inf
        %1021 = vmax.xlane.f32.xlu0 %v1020
        %v1022 = vpop.xlane.xlu0 %1021
        %v1023 = vsub.f32 %v1010, %v1019
        %v1024 = vsub.f32 %v1013, %v1022
        %v1025 = vmul.f32 %v1023, 1.442695
        %v1026 = vpow.pop %v1025
        %v1027 = vmul.f32 %v1024, 1.442695
        %v1028 = vpow.pop %v1027
        %v1029 = vsel %vm1016, %v1026, 0.0
        %1030 = vadd.xlane.f32.xlu0 %v1029
        %v1031 = vpop.xlane.xlu0 %1030
        %v1032 = vsel %vm1016, %v1028, 0.0
        %1033 = vadd.xlane.f32.xlu0 %v1032
        %v1034 = vpop.xlane.xlu0 %1033
        %v1035 = vpack.c.bf16 %v1028, %v1026
        %v1037 = vsel %vm1016, %v1035, 0
        %1039 = vmatprep.subr.bf16.mxu0 0
        %1040 = vmatpush1.bf16.msra.mxu0 %v967
        %1041 = vmatprep.subr.bf16.mxu0 0
        %1042 = vmatpush1.bf16.msra.mxu0 0
        %1043 = vmatprep.subr.bf16.mxu0 0
        %1044 = vmatpush1.bf16.msra.mxu0 0
        %1045 = vmatprep.subr.bf16.mxu0 0
        %1046 = vmatpush1.bf16.msra.mxu0 0
        %1047 = vmatprep.subr.bf16.mxu0 0
        %1048 = vmatpush1.bf16.msra.mxu0 0
        %1049 = vmatprep.subr.bf16.mxu0 0
        %1050 = vmatpush1.bf16.msra.mxu0 0
        %1051 = vmatprep.subr.bf16.mxu0 0
        %1052 = vmatpush1.bf16.msra.mxu0 0
        %1053 = vmatprep.subr.bf16.mxu0 0
        %1054 = vmatpush1.bf16.msra.mxu0 0
        %1055 = vmatprep.subr.bf16.mxu0 0
        %1056 = vmatpush1.bf16.msra.mxu0 0
        %1057 = vmatprep.subr.bf16.mxu0 0
        %1058 = vmatpush1.bf16.msra.mxu0 0
        %1059 = vmatprep.subr.bf16.mxu0 0
        %1060 = vmatpush1.bf16.msra.mxu0 0
        %1061 = vmatprep.subr.bf16.mxu0 0
        %1062 = vmatpush1.bf16.msra.mxu0 0
        %1063 = vmatprep.subr.bf16.mxu0 0
        %1064 = vmatpush1.bf16.msra.mxu0 0
        %1065 = vmatprep.subr.bf16.mxu0 0
        %1066 = vmatpush1.bf16.msra.mxu0 0
        %1067 = vmatprep.subr.bf16.mxu0 0
        %1068 = vmatpush1.bf16.msra.mxu0 0
        %1069 = vmatprep.subr.bf16.mxu0 0
        %1070 = vmatpush1.bf16.msra.mxu0 0
        %1071 = vmatprep.mubr.bf16.mxu0 0
        %1072 = vmatmul.mubr.bf16.gmra.mrb[0].mxu0 %v1037
        %v1073 = vpop.f32.mrb[0].mxu0
        %v1074 = vadd.f32 0.0, %v1073
        %v1075 = vpop.f32.mrb[0].mxu0
        %v1076 = vpop.f32.mrb[0].mxu0
        %v1077 = vadd.f32 0.0, %v1076
        %v1078 = vpop.f32.mrb[0].mxu0
        %1079 = vdwg.mxu0
        %v1080 = vrcp.pop %v1031
        %v1081 = vrcp.pop %v1034
        %v1082 = vmul.f32 %v1074, %v1080
        %v1083 = vmul.f32 %v1077, %v1081
        %v1084 = vpack.c.bf16 %v1083, %v1082
        %1085 = vst.msk [vmem:[#allocation2] sm:$0xff] %vm968, %v1084
        %1087 = vrot.lane.b32.xlu0 %v965, 96
        %v1088 = vpop.permute.xlu0 %1087
        %1090 = vrot.lane.b32.xlu0 %v966, 96
        %v1091 = vpop.permute.xlu0 %1090
        %v1093 = vsel %vm968, %v1088, 0
        %v1096 = vsel %vm968, %v1091, 0
        %1098 = vmatprep.subr.bf16.mxu0 0
        %1099 = vmatpush1.bf16.xpose.msra.mxu0 %v1096
        %1100 = vmatprep.subr.bf16.mxu0 0
        %1101 = vmatpush1.bf16.xpose.msra.mxu0 0
        %1102 = vmatprep.subr.bf16.mxu0 0
        %1103 = vmatpush1.bf16.xpose.msra.mxu0 0
        %1104 = vmatprep.subr.bf16.mxu0 0
        %1105 = vmatpush1.bf16.xpose.msra.mxu0 0
        %1106 = vmatprep.subr.bf16.mxu0 0
        %1107 = vmatpush1.bf16.xpose.msra.mxu0 0
        %1108 = vmatprep.subr.bf16.mxu0 0
        %1109 = vmatpush1.bf16.xpose.msra.mxu0 0
        %1110 = vmatprep.subr.bf16.mxu0 0
        %1111 = vmatpush1.bf16.xpose.msra.mxu0 0
        %1112 = vmatprep.subr.bf16.mxu0 0
        %1113 = vmatpush1.bf16.xpose.msra.mxu0 0
        %1114 = vmatprep.subr.bf16.mxu0 0
        %1115 = vmatpush1.bf16.xpose.msra.mxu0 0
        %1116 = vmatprep.subr.bf16.mxu0 0
        %1117 = vmatpush1.bf16.xpose.msra.mxu0 0
        %1118 = vmatprep.subr.bf16.mxu0 0
        %1119 = vmatpush1.bf16.xpose.msra.mxu0 0
        %1120 = vmatprep.subr.bf16.mxu0 0
        %1121 = vmatpush1.bf16.xpose.msra.mxu0 0
        %1122 = vmatprep.subr.bf16.mxu0 0
        %1123 = vmatpush1.bf16.xpose.msra.mxu0 0
        %1124 = vmatprep.subr.bf16.mxu0 0
        %1125 = vmatpush1.bf16.xpose.msra.mxu0 0
        %1126 = vmatprep.subr.bf16.mxu0 0
        %1127 = vmatpush1.bf16.xpose.msra.mxu0 0
        %1128 = vmatprep.subr.bf16.mxu0 0
        %1129 = vmatpush1.bf16.xpose.msra.mxu0 0
        %1130 = vmatprep.mubr.bf16.mxu0 0
        %1131 = vmatmul.mubr.bf16.gmra.mrb[0].mxu0 %v1093
        %v1132 = vpop.f32.mrb[0].mxu0
        %v1133 = vadd.f32 0.0, %v1132
        %v1134 = vpop.f32.mrb[0].mxu0
        %v1135 = vpop.f32.mrb[0].mxu0
        %v1136 = vadd.f32 0.0, %v1135
        %v1137 = vpop.f32.mrb[0].mxu0
        %1138 = vdwg.mxu0
        %v1139 = vsel %vm1016, %v1133, -inf
        %1140 = vmax.xlane.f32.xlu0 %v1139
        %v1141 = vpop.xlane.xlu0 %1140
        %v1142 = vsel %vm1016, %v1136, -inf
        %1143 = vmax.xlane.f32.xlu0 %v1142
        %v1144 = vpop.xlane.xlu0 %1143
        %v1145 = vsub.f32 %v1133, %v1141
        %v1146 = vsub.f32 %v1136, %v1144
        %v1147 = vmul.f32 %v1145, 1.442695
        %v1148 = vpow.pop %v1147
        %v1149 = vmul.f32 %v1146, 1.442695
        %v1150 = vpow.pop %v1149
        %v1151 = vsel %vm1016, %v1148, 0.0
        %1152 = vadd.xlane.f32.xlu0 %v1151
        %v1153 = vpop.xlane.xlu0 %1152
        %v1154 = vsel %vm1016, %v1150, 0.0
        %1155 = vadd.xlane.f32.xlu0 %v1154
        %v1156 = vpop.xlane.xlu0 %1155
        %v1157 = vpack.c.bf16 %v1150, %v1148
        %1159 = vrot.lane.b32.xlu0 %v967, 96
        %v1160 = vpop.permute.xlu0 %1159
        %v1163 = vsel %vm1016, %v1157, 0
        %1165 = vmatprep.subr.bf16.mxu0 0
        %1166 = vmatpush1.bf16.msra.mxu0 %v1160
        %1167 = vmatprep.subr.bf16.mxu0 0
        %1168 = vmatpush1.bf16.msra.mxu0 0
        %1169 = vmatprep.subr.bf16.mxu0 0
        %1170 = vmatpush1.bf16.msra.mxu0 0
        %1171 = vmatprep.subr.bf16.mxu0 0
        %1172 = vmatpush1.bf16.msra.mxu0 0
        %1173 = vmatprep.subr.bf16.mxu0 0
        %1174 = vmatpush1.bf16.msra.mxu0 0
        %1175 = vmatprep.subr.bf16.mxu0 0
        %1176 = vmatpush1.bf16.msra.mxu0 0
        %1177 = vmatprep.subr.bf16.mxu0 0
        %1178 = vmatpush1.bf16.msra.mxu0 0
        %1179 = vmatprep.subr.bf16.mxu0 0
        %1180 = vmatpush1.bf16.msra.mxu0 0
        %1181 = vmatprep.subr.bf16.mxu0 0
        %1182 = vmatpush1.bf16.msra.mxu0 0
        %1183 = vmatprep.subr.bf16.mxu0 0
        %1184 = vmatpush1.bf16.msra.mxu0 0
        %1185 = vmatprep.subr.bf16.mxu0 0
        %1186 = vmatpush1.bf16.msra.mxu0 0
        %1187 = vmatprep.subr.bf16.mxu0 0
        %1188 = vmatpush1.bf16.msra.mxu0 0
        %1189 = vmatprep.subr.bf16.mxu0 0
        %1190 = vmatpush1.bf16.msra.mxu0 0
        %1191 = vmatprep.subr.bf16.mxu0 0
        %1192 = vmatpush1.bf16.msra.mxu0 0
        %1193 = vmatprep.subr.bf16.mxu0 0
        %1194 = vmatpush1.bf16.msra.mxu0 0
        %1195 = vmatprep.subr.bf16.mxu0 0
        %1196 = vmatpush1.bf16.msra.mxu0 0
        %1197 = vmatprep.mubr.bf16.mxu0 0
        %1198 = vmatmul.mubr.bf16.gmra.mrb[0].mxu0 %v1163
        %v1199 = vpop.f32.mrb[0].mxu0
        %v1200 = vadd.f32 0.0, %v1199
        %v1201 = vpop.f32.mrb[0].mxu0
        %v1202 = vpop.f32.mrb[0].mxu0
        %v1203 = vadd.f32 0.0, %v1202
        %v1204 = vpop.f32.mrb[0].mxu0
        %1205 = vdwg.mxu0
        %v1206 = vrcp.pop %v1153
        %v1207 = vrcp.pop %v1156
        %v1208 = vmul.f32 %v1200, %v1206
        %v1209 = vmul.f32 %v1203, %v1207
        %v1210 = vpack.c.bf16 %v1209, %v1208
        %1212 = vrot.lane.b32.xlu0 %v1210, 32
        %v1213 = vpop.permute.xlu0 %1212
        %vm1215 = vcmask 523520
        %1216 = vst.msk [vmem:[#allocation2] sm:$0xff] %vm1215, %v1213
        %1217 = vrot.lane.b32.xlu0 %v965, 64
        %v1218 = vpop.permute.xlu0 %1217
        %1219 = vrot.lane.b32.xlu0 %v966, 64
        %v1220 = vpop.permute.xlu0 %1219
        %v1222 = vsel %vm968, %v1218, 0
        %v1225 = vsel %vm968, %v1220, 0
        %1227 = vmatprep.subr.bf16.mxu0 0
        %1228 = vmatpush1.bf16.xpose.msra.mxu0 %v1225
        %1229 = vmatprep.subr.bf16.mxu0 0
        %1230 = vmatpush1.bf16.xpose.msra.mxu0 0
        %1231 = vmatprep.subr.bf16.mxu0 0
        %1232 = vmatpush1.bf16.xpose.msra.mxu0 0
        %1233 = vmatprep.subr.bf16.mxu0 0
        %1234 = vmatpush1.bf16.xpose.msra.mxu0 0
        %1235 = vmatprep.subr.bf16.mxu0 0
        %1236 = vmatpush1.bf16.xpose.msra.mxu0 0
        %1237 = vmatprep.subr.bf16.mxu0 0
        %1238 = vmatpush1.bf16.xpose.msra.mxu0 0
        %1239 = vmatprep.subr.bf16.mxu0 0
        %1240 = vmatpush1.bf16.xpose.msra.mxu0 0
        %1241 = vmatprep.subr.bf16.mxu0 0
        %1242 = vmatpush1.bf16.xpose.msra.mxu0 0
        %1243 = vmatprep.subr.bf16.mxu0 0
        %1244 = vmatpush1.bf16.xpose.msra.mxu0 0
        %1245 = vmatprep.subr.bf16.mxu0 0
        %1246 = vmatpush1.bf16.xpose.msra.mxu0 0
        %1247 = vmatprep.subr.bf16.mxu0 0
        %1248 = vmatpush1.bf16.xpose.msra.mxu0 0
        %1249 = vmatprep.subr.bf16.mxu0 0
        %1250 = vmatpush1.bf16.xpose.msra.mxu0 0
        %1251 = vmatprep.subr.bf16.mxu0 0
        %1252 = vmatpush1.bf16.xpose.msra.mxu0 0
        %1253 = vmatprep.subr.bf16.mxu0 0
        %1254 = vmatpush1.bf16.xpose.msra.mxu0 0
        %1255 = vmatprep.subr.bf16.mxu0 0
        %1256 = vmatpush1.bf16.xpose.msra.mxu0 0
        %1257 = vmatprep.subr.bf16.mxu0 0
        %1258 = vmatpush1.bf16.xpose.msra.mxu0 0
        %1259 = vmatprep.mubr.bf16.mxu0 0
        %1260 = vmatmul.mubr.bf16.gmra.mrb[0].mxu0 %v1222
        %v1261 = vpop.f32.mrb[0].mxu0
        %v1262 = vadd.f32 0.0, %v1261
        %v1263 = vpop.f32.mrb[0].mxu0
        %v1264 = vpop.f32.mrb[0].mxu0
        %v1265 = vadd.f32 0.0, %v1264
        %v1266 = vpop.f32.mrb[0].mxu0
        %1267 = vdwg.mxu0
        %v1268 = vsel %vm1016, %v1262, -inf
        %1269 = vmax.xlane.f32.xlu0 %v1268
        %v1270 = vpop.xlane.xlu0 %1269
        %v1271 = vsel %vm1016, %v1265, -inf
        %1272 = vmax.xlane.f32.xlu0 %v1271
        %v1273 = vpop.xlane.xlu0 %1272
        %v1274 = vsub.f32 %v1262, %v1270
        %v1275 = vsub.f32 %v1265, %v1273
        %v1276 = vmul.f32 %v1274, 1.442695
        %v1277 = vpow.pop %v1276
        %v1278 = vmul.f32 %v1275, 1.442695
        %v1279 = vpow.pop %v1278
        %v1280 = vsel %vm1016, %v1277, 0.0
        %1281 = vadd.xlane.f32.xlu0 %v1280
        %v1282 = vpop.xlane.xlu0 %1281
        %v1283 = vsel %vm1016, %v1279, 0.0
        %1284 = vadd.xlane.f32.xlu0 %v1283
        %v1285 = vpop.xlane.xlu0 %1284
        %v1286 = vpack.c.bf16 %v1279, %v1277
        %1287 = vrot.lane.b32.xlu0 %v967, 64
        %v1288 = vpop.permute.xlu0 %1287
        %v1291 = vsel %vm1016, %v1286, 0
        %1293 = vmatprep.subr.bf16.mxu0 0
        %1294 = vmatpush1.bf16.msra.mxu0 %v1288
        %1295 = vmatprep.subr.bf16.mxu0 0
        %1296 = vmatpush1.bf16.msra.mxu0 0
        %1297 = vmatprep.subr.bf16.mxu0 0
        %1298 = vmatpush1.bf16.msra.mxu0 0
        %1299 = vmatprep.subr.bf16.mxu0 0
        %1300 = vmatpush1.bf16.msra.mxu0 0
        %1301 = vmatprep.subr.bf16.mxu0 0
        %1302 = vmatpush1.bf16.msra.mxu0 0
        %1303 = vmatprep.subr.bf16.mxu0 0
        %1304 = vmatpush1.bf16.msra.mxu0 0
        %1305 = vmatprep.subr.bf16.mxu0 0
        %1306 = vmatpush1.bf16.msra.mxu0 0
        %1307 = vmatprep.subr.bf16.mxu0 0
        %1308 = vmatpush1.bf16.msra.mxu0 0
        %1309 = vmatprep.subr.bf16.mxu0 0
        %1310 = vmatpush1.bf16.msra.mxu0 0
        %1311 = vmatprep.subr.bf16.mxu0 0
        %1312 = vmatpush1.bf16.msra.mxu0 0
        %1313 = vmatprep.subr.bf16.mxu0 0
        %1314 = vmatpush1.bf16.msra.mxu0 0
        %1315 = vmatprep.subr.bf16.mxu0 0
        %1316 = vmatpush1.bf16.msra.mxu0 0
        %1317 = vmatprep.subr.bf16.mxu0 0
        %1318 = vmatpush1.bf16.msra.mxu0 0
        %1319 = vmatprep.subr.bf16.mxu0 0
        %1320 = vmatpush1.bf16.msra.mxu0 0
        %1321 = vmatprep.subr.bf16.mxu0 0
        %1322 = vmatpush1.bf16.msra.mxu0 0
        %1323 = vmatprep.subr.bf16.mxu0 0
        %1324 = vmatpush1.bf16.msra.mxu0 0
        %1325 = vmatprep.mubr.bf16.mxu0 0
        %1326 = vmatmul.mubr.bf16.gmra.mrb[0].mxu0 %v1291
        %v1327 = vpop.f32.mrb[0].mxu0
        %v1328 = vadd.f32 0.0, %v1327
        %v1329 = vpop.f32.mrb[0].mxu0
        %v1330 = vpop.f32.mrb[0].mxu0
        %v1331 = vadd.f32 0.0, %v1330
        %v1332 = vpop.f32.mrb[0].mxu0
        %1333 = vdwg.mxu0
        %v1334 = vrcp.pop %v1282
        %v1335 = vrcp.pop %v1285
        %v1336 = vmul.f32 %v1328, %v1334
        %v1337 = vmul.f32 %v1331, %v1335
        %v1338 = vpack.c.bf16 %v1337, %v1336
        %1340 = vrot.lane.b32.xlu0 %v1338, 64
        %v1341 = vpop.permute.xlu0 %1340
        %vm1343 = vcmask 785920
        %1344 = vst.msk [vmem:[#allocation2] sm:$0xff] %vm1343, %v1341
        %1345 = vrot.lane.b32.xlu0 %v965, 32
        %v1346 = vpop.permute.xlu0 %1345
        %1347 = vrot.lane.b32.xlu0 %v966, 32
        %v1348 = vpop.permute.xlu0 %1347
        %v1350 = vsel %vm968, %v1346, 0
        %v1353 = vsel %vm968, %v1348, 0
        %1355 = vmatprep.subr.bf16.mxu0 0
        %1356 = vmatpush1.bf16.xpose.msra.mxu0 %v1353
        %1357 = vmatprep.subr.bf16.mxu0 0
        %1358 = vmatpush1.bf16.xpose.msra.mxu0 0
        %1359 = vmatprep.subr.bf16.mxu0 0
        %1360 = vmatpush1.bf16.xpose.msra.mxu0 0
        %1361 = vmatprep.subr.bf16.mxu0 0
        %1362 = vmatpush1.bf16.xpose.msra.mxu0 0
        %1363 = vmatprep.subr.bf16.mxu0 0
        %1364 = vmatpush1.bf16.xpose.msra.mxu0 0
        %1365 = vmatprep.subr.bf16.mxu0 0
        %1366 = vmatpush1.bf16.xpose.msra.mxu0 0
        %1367 = vmatprep.subr.bf16.mxu0 0
        %1368 = vmatpush1.bf16.xpose.msra.mxu0 0
        %1369 = vmatprep.subr.bf16.mxu0 0
        %1370 = vmatpush1.bf16.xpose.msra.mxu0 0
        %1371 = vmatprep.subr.bf16.mxu0 0
        %1372 = vmatpush1.bf16.xpose.msra.mxu0 0
        %1373 = vmatprep.subr.bf16.mxu0 0
        %1374 = vmatpush1.bf16.xpose.msra.mxu0 0
        %1375 = vmatprep.subr.bf16.mxu0 0
        %1376 = vmatpush1.bf16.xpose.msra.mxu0 0
        %1377 = vmatprep.subr.bf16.mxu0 0
        %1378 = vmatpush1.bf16.xpose.msra.mxu0 0
        %1379 = vmatprep.subr.bf16.mxu0 0
        %1380 = vmatpush1.bf16.xpose.msra.mxu0 0
        %1381 = vmatprep.subr.bf16.mxu0 0
        %1382 = vmatpush1.bf16.xpose.msra.mxu0 0
        %1383 = vmatprep.subr.bf16.mxu0 0
        %1384 = vmatpush1.bf16.xpose.msra.mxu0 0
        %1385 = vmatprep.subr.bf16.mxu0 0
        %1386 = vmatpush1.bf16.xpose.msra.mxu0 0
        %1387 = vmatprep.mubr.bf16.mxu0 0
        %1388 = vmatmul.mubr.bf16.gmra.mrb[0].mxu0 %v1350
        %v1389 = vpop.f32.mrb[0].mxu0
        %v1390 = vadd.f32 0.0, %v1389
        %v1391 = vpop.f32.mrb[0].mxu0
        %v1392 = vpop.f32.mrb[0].mxu0
        %v1393 = vadd.f32 0.0, %v1392
        %v1394 = vpop.f32.mrb[0].mxu0
        %1395 = vdwg.mxu0
        %v1396 = vsel %vm1016, %v1390, -inf
        %1397 = vmax.xlane.f32.xlu0 %v1396
        %v1398 = vpop.xlane.xlu0 %1397
        %v1399 = vsel %vm1016, %v1393, -inf
        %1400 = vmax.xlane.f32.xlu0 %v1399
        %v1401 = vpop.xlane.xlu0 %1400
        %v1402 = vsub.f32 %v1390, %v1398
        %v1403 = vsub.f32 %v1393, %v1401
        %v1404 = vmul.f32 %v1402, 1.442695
        %v1405 = vpow.pop %v1404
        %v1406 = vmul.f32 %v1403, 1.442695
        %v1407 = vpow.pop %v1406
        %v1408 = vsel %vm1016, %v1405, 0.0
        %1409 = vadd.xlane.f32.xlu0 %v1408
        %v1410 = vpop.xlane.xlu0 %1409
        %v1411 = vsel %vm1016, %v1407, 0.0
        %1412 = vadd.xlane.f32.xlu0 %v1411
        %v1413 = vpop.xlane.xlu0 %1412
        %v1414 = vpack.c.bf16 %v1407, %v1405
        %1415 = vrot.lane.b32.xlu0 %v967, 32
        %v1416 = vpop.permute.xlu0 %1415
        %v1419 = vsel %vm1016, %v1414, 0
        %1421 = vmatprep.subr.bf16.mxu0 0
        %1422 = vmatpush1.bf16.msra.mxu0 %v1416
        %1423 = vmatprep.subr.bf16.mxu0 0
        %1424 = vmatpush1.bf16.msra.mxu0 0
        %1425 = vmatprep.subr.bf16.mxu0 0
        %1426 = vmatpush1.bf16.msra.mxu0 0
        %1427 = vmatprep.subr.bf16.mxu0 0
        %1428 = vmatpush1.bf16.msra.mxu0 0
        %1429 = vmatprep.subr.bf16.mxu0 0
        %1430 = vmatpush1.bf16.msra.mxu0 0
        %1431 = vmatprep.subr.bf16.mxu0 0
        %1432 = vmatpush1.bf16.msra.mxu0 0
        %1433 = vmatprep.subr.bf16.mxu0 0
        %1434 = vmatpush1.bf16.msra.mxu0 0
        %1435 = vmatprep.subr.bf16.mxu0 0
        %1436 = vmatpush1.bf16.msra.mxu0 0
        %1437 = vmatprep.subr.bf16.mxu0 0
        %1438 = vmatpush1.bf16.msra.mxu0 0
        %1439 = vmatprep.subr.bf16.mxu0 0
        %1440 = vmatpush1.bf16.msra.mxu0 0
        %1441 = vmatprep.subr.bf16.mxu0 0
        %1442 = vmatpush1.bf16.msra.mxu0 0
        %1443 = vmatprep.subr.bf16.mxu0 0
        %1444 = vmatpush1.bf16.msra.mxu0 0
        %1445 = vmatprep.subr.bf16.mxu0 0
        %1446 = vmatpush1.bf16.msra.mxu0 0
        %1447 = vmatprep.subr.bf16.mxu0 0
        %1448 = vmatpush1.bf16.msra.mxu0 0
        %1449 = vmatprep.subr.bf16.mxu0 0
        %1450 = vmatpush1.bf16.msra.mxu0 0
        %1451 = vmatprep.subr.bf16.mxu0 0
        %1452 = vmatpush1.bf16.msra.mxu0 0
        %1453 = vmatprep.mubr.bf16.mxu0 0
        %1454 = vmatmul.mubr.bf16.gmra.mrb[0].mxu0 %v1419
        %v1455 = vpop.f32.mrb[0].mxu0
        %v1456 = vadd.f32 0.0, %v1455
        %v1457 = vpop.f32.mrb[0].mxu0
        %v1458 = vpop.f32.mrb[0].mxu0
        %v1459 = vadd.f32 0.0, %v1458
        %v1460 = vpop.f32.mrb[0].mxu0
        %1461 = vdwg.mxu0
        %v1462 = vrcp.pop %v1410
        %v1463 = vrcp.pop %v1413
        %v1464 = vmul.f32 %v1456, %v1462
        %v1465 = vmul.f32 %v1459, %v1463
        %v1466 = vpack.c.bf16 %v1465, %v1464
        %1468 = vrot.lane.b32.xlu0 %v1466, 96
        %v1469 = vpop.permute.xlu0 %1468
        %vm1471 = vcmask 1048320
        %1472 = vst.msk [vmem:[#allocation2] sm:$0xff] %vm1471, %v1469
        %v1473 = vld [vmem:[#allocation2] sm:$0xff]
        %v1474 = vld [vmem:[#allocation11] sm:$0xf]
        %v1475 = vld [vmem:[#allocation11 + $0x4] sm:$0xf]
        %v1476 = vld [vmem:[#allocation11 + $0x8] sm:$0xf]
        %v1477 = vld [vmem:[#allocation11 + $0xc] sm:$0xf]
        %v1478 = vld [vmem:[#allocation11 + $0x10] sm:$0xf]
        %v1479 = vld [vmem:[#allocation11 + $0x14] sm:$0xf]
        %v1480 = vld [vmem:[#allocation11 + $0x18] sm:$0xf]
        %v1481 = vld [vmem:[#allocation11 + $0x1c] sm:$0xf]
        %v1482 = vld [vmem:[#allocation11 + $0x20] sm:$0xf]
        %v1483 = vld [vmem:[#allocation11 + $0x24] sm:$0xf]
        %v1484 = vld [vmem:[#allocation11 + $0x28] sm:$0xf]
        %v1485 = vld [vmem:[#allocation11 + $0x2c] sm:$0xf]
        %v1486 = vld [vmem:[#allocation11 + $0x30] sm:$0xf]
        %v1487 = vld [vmem:[#allocation11 + $0x34] sm:$0xf]
        %v1488 = vld [vmem:[#allocation11 + $0x38] sm:$0xf]
        %v1489 = vld [vmem:[#allocation11 + $0x3c] sm:$0xf]
        %v1490 = vld [vmem:[%s9] sm:$0x1]
        %v1492 = vlaneseq
        %v1493 = vshrl.u32 %v1492, 7
        %v1494 = vsub.s32 0, %v1493
        %v1495 = vrot.slane %v1490, %v1494
        %v1513 = vunpack.c.l.b16 %v1474
        %v1514 = vunpack.c.l.b16 %v1475
        %v1515 = vunpack.c.l.b16 %v1476
        %v1516 = vunpack.c.l.b16 %v1477
        %v1517 = vunpack.c.l.b16 %v1478
        %v1518 = vunpack.c.l.b16 %v1479
        %v1519 = vunpack.c.l.b16 %v1480
        %v1520 = vunpack.c.l.b16 %v1481
        %v1521 = vunpack.c.l.b16 %v1482
        %v1522 = vunpack.c.l.b16 %v1483
        %v1523 = vunpack.c.l.b16 %v1484
        %v1524 = vunpack.c.l.b16 %v1485
        %v1525 = vunpack.c.l.b16 %v1486
        %v1526 = vunpack.c.l.b16 %v1487
        %v1527 = vunpack.c.l.b16 %v1488
        %v1528 = vunpack.c.l.b16 %v1489
        %v1529 = vpack.c.b16 %v1514, %v1513
        %v1530 = vpack.c.b16 %v1516, %v1515
        %v1531 = vpack.c.b16 %v1518, %v1517
        %v1532 = vpack.c.b16 %v1520, %v1519
        %v1533 = vpack.c.b16 %v1522, %v1521
        %v1534 = vpack.c.b16 %v1524, %v1523
        %v1535 = vpack.c.b16 %v1526, %v1525
        %v1536 = vpack.c.b16 %v1528, %v1527
        %1545 = vmatprep.subr.bf16.mxu0 0
        %1546 = vmatpush1.bf16.msra.mxu0 %v1529
        %1547 = vmatprep.subr.bf16.mxu0 0
        %1548 = vmatpush1.bf16.msra.mxu0 %v1530
        %1549 = vmatprep.subr.bf16.mxu0 0
        %1550 = vmatpush1.bf16.msra.mxu0 %v1531
        %1551 = vmatprep.subr.bf16.mxu0 0
        %1552 = vmatpush1.bf16.msra.mxu0 %v1532
        %1553 = vmatprep.subr.bf16.mxu0 0
        %1554 = vmatpush1.bf16.msra.mxu0 %v1533
        %1555 = vmatprep.subr.bf16.mxu0 0
        %1556 = vmatpush1.bf16.msra.mxu0 %v1534
        %1557 = vmatprep.subr.bf16.mxu0 0
        %1558 = vmatpush1.bf16.msra.mxu0 %v1535
        %1559 = vmatprep.subr.bf16.mxu0 0
        %1560 = vmatpush1.bf16.msra.mxu0 %v1536
        %1561 = vmatprep.subr.bf16.mxu0 0
        %1562 = vmatpush1.bf16.msra.mxu0 0
        %1563 = vmatprep.subr.bf16.mxu0 0
        %1564 = vmatpush1.bf16.msra.mxu0 0
        %1565 = vmatprep.subr.bf16.mxu0 0
        %1566 = vmatpush1.bf16.msra.mxu0 0
        %1567 = vmatprep.subr.bf16.mxu0 0
        %1568 = vmatpush1.bf16.msra.mxu0 0
        %1569 = vmatprep.subr.bf16.mxu0 0
        %1570 = vmatpush1.bf16.msra.mxu0 0
        %1571 = vmatprep.subr.bf16.mxu0 0
        %1572 = vmatpush1.bf16.msra.mxu0 0
        %1573 = vmatprep.subr.bf16.mxu0 0
        %1574 = vmatpush1.bf16.msra.mxu0 0
        %1575 = vmatprep.subr.bf16.mxu0 0
        %1576 = vmatpush1.bf16.msra.mxu0 0
        %1577 = vmatprep.mubr.bf16.mxu0 0
        %1578 = vmatmul.mubr.bf16.gmra.mrb[0].mxu0 %v1473
        %v1579 = vpop.f32.mrb[0].mxu0
        %v1580 = vadd.f32 %v1495, %v1579
        %v1581 = vpop.f32.mrb[0].mxu0
        %v1582 = vpop.f32.mrb[0].mxu0
        %v1583 = vadd.f32 %v1495, %v1582
        %v1584 = vpop.f32.mrb[0].mxu0
        %1585 = vdwg.mxu0
        %v1586 = vadd.f32 %v653, %v1580
        %v1587 = vadd.f32 %v654, %v1583
        %v1588 = vld [vmem:[%s10] sm:$0x1]
        %v1589 = vld [vmem:[%s11] sm:$0x1]
        %1590 = vadd.xlane.f32.xlu0 %v1586
        %v1591 = vpop.xlane.xlu0 %1590
        %1592 = vadd.xlane.f32.xlu0 %v1587
        %v1593 = vpop.xlane.xlu0 %1592
        %v1594 = vmul.f32 %v1591, %v661
        %v1595 = vmul.f32 %v1593, %v661
        %v1596 = vsub.f32 %v1586, %v1594
        %v1597 = vsub.f32 %v1587, %v1595
        %v1598 = vmul.f32 %v1596, %v1596
        %v1599 = vmul.f32 %v1597, %v1597
        %1600 = vadd.xlane.f32.xlu0 %v1598
        %v1601 = vpop.xlane.xlu0 %1600
        %1602 = vadd.xlane.f32.xlu0 %v1599
        %v1603 = vpop.xlane.xlu0 %1602
        %v1604 = vmul.f32 %v1601, %v661
        %v1605 = vmul.f32 %v1603, %v661
        %v1606 = vadd.f32 %v1604, 1e-05
        %v1607 = vadd.f32 %v1605, 1e-05
        %v1608 = vrsqrt.pop %v1606
        %v1609 = vrsqrt.pop %v1607
        %v1610 = vmul.f32 %v1596, %v1608
        %v1611 = vmul.f32 %v1597, %v1609
        %v1613 = vlaneseq
        %v1614 = vshrl.u32 %v1613, 7
        %v1615 = vsub.s32 0, %v1614
        %v1616 = vrot.slane %v1588, %v1615
        %v1618 = vmul.f32 %v1610, %v1616
        %v1619 = vmul.f32 %v1611, %v1616
        %v1621 = vlaneseq
        %v1622 = vshrl.u32 %v1621, 7
        %v1623 = vsub.s32 0, %v1622
        %v1624 = vrot.slane %v1589, %v1623
        %v1626 = vadd.f32 %v1618, %v1624
        %v1627 = vadd.f32 %v1619, %v1624
        %v1628 = vpack.c.bf16 %v1627, %v1626
        %v1629 = vld [vmem:[#allocation12] sm:$0xff]
        %v1630 = vld [vmem:[#allocation12 + $0x8] sm:$0xff]
        %v1631 = vld [vmem:[#allocation12 + $0x10] sm:$0xff]
        %v1632 = vld [vmem:[#allocation12 + $0x18] sm:$0xff]
        %v1633 = vld [vmem:[#allocation12 + $0x20] sm:$0xff]
        %v1634 = vld [vmem:[#allocation12 + $0x28] sm:$0xff]
        %v1635 = vld [vmem:[#allocation12 + $0x30] sm:$0xff]
        %v1636 = vld [vmem:[#allocation12 + $0x38] sm:$0xff]
        %v1637 = vld [vmem:[#allocation12 + $0x40] sm:$0xff]
        %v1638 = vld [vmem:[#allocation12 + $0x48] sm:$0xff]
        %v1639 = vld [vmem:[#allocation12 + $0x50] sm:$0xff]
        %v1640 = vld [vmem:[#allocation12 + $0x58] sm:$0xff]
        %v1641 = vld [vmem:[#allocation12 + $0x60] sm:$0xff]
        %v1642 = vld [vmem:[#allocation12 + $0x68] sm:$0xff]
        %v1643 = vld [vmem:[#allocation12 + $0x70] sm:$0xff]
        %v1644 = vld [vmem:[#allocation12 + $0x78] sm:$0xff]
        %v1645 = vld [vmem:[%s13] sm:$0x3]
        %v1647 = vlaneseq
        %v1648 = vshrl.u32 %v1647, 7
        %v1649 = vsub.s32 0, %v1648
        %v1650 = vrot.slane %v1645, %v1649
        %v1651 = vlaneseq
        %v1652 = vshrl.u32 %v1651, 7
        %v1653 = vsub.s32 1, %v1652
        %v1654 = vrot.slane %v1645, %v1653
        %v1673 = vunpack.c.l.b16 %v1629
        %v1674 = vunpack.c.h.b16 %v1629
        %v1675 = vunpack.c.l.b16 %v1630
        %v1676 = vunpack.c.h.b16 %v1630
        %v1677 = vunpack.c.l.b16 %v1631
        %v1678 = vunpack.c.h.b16 %v1631
        %v1679 = vunpack.c.l.b16 %v1632
        %v1680 = vunpack.c.h.b16 %v1632
        %v1681 = vunpack.c.l.b16 %v1633
        %v1682 = vunpack.c.h.b16 %v1633
        %v1683 = vunpack.c.l.b16 %v1634
        %v1684 = vunpack.c.h.b16 %v1634
        %v1685 = vunpack.c.l.b16 %v1635
        %v1686 = vunpack.c.h.b16 %v1635
        %v1687 = vunpack.c.l.b16 %v1636
        %v1688 = vunpack.c.h.b16 %v1636
        %v1689 = vunpack.c.l.b16 %v1637
        %v1690 = vunpack.c.h.b16 %v1637
        %v1691 = vunpack.c.l.b16 %v1638
        %v1692 = vunpack.c.h.b16 %v1638
        %v1693 = vunpack.c.l.b16 %v1639
        %v1694 = vunpack.c.h.b16 %v1639
        %v1695 = vunpack.c.l.b16 %v1640
        %v1696 = vunpack.c.h.b16 %v1640
        %v1697 = vunpack.c.l.b16 %v1641
        %v1698 = vunpack.c.h.b16 %v1641
        %v1699 = vunpack.c.l.b16 %v1642
        %v1700 = vunpack.c.h.b16 %v1642
        %v1701 = vunpack.c.l.b16 %v1643
        %v1702 = vunpack.c.h.b16 %v1643
        %v1703 = vunpack.c.l.b16 %v1644
        %v1704 = vunpack.c.h.b16 %v1644
        %v1705 = vpack.c.b16 %v1675, %v1673
        %v1706 = vpack.c.b16 %v1676, %v1674
        %v1707 = vpack.c.b16 %v1679, %v1677
        %v1708 = vpack.c.b16 %v1680, %v1678
        %v1709 = vpack.c.b16 %v1683, %v1681
        %v1710 = vpack.c.b16 %v1684, %v1682
        %v1711 = vpack.c.b16 %v1687, %v1685
        %v1712 = vpack.c.b16 %v1688, %v1686
        %v1713 = vpack.c.b16 %v1691, %v1689
        %v1714 = vpack.c.b16 %v1692, %v1690
        %v1715 = vpack.c.b16 %v1695, %v1693
        %v1716 = vpack.c.b16 %v1696, %v1694
        %v1717 = vpack.c.b16 %v1699, %v1697
        %v1718 = vpack.c.b16 %v1700, %v1698
        %v1719 = vpack.c.b16 %v1703, %v1701
        %v1720 = vpack.c.b16 %v1704, %v1702
        %1737 = vmatprep.subr.bf16.mxu0 %v1706
        %1738 = vmatpush1.bf16.msra.mxu0 %v1705
        %1739 = vmatprep.subr.bf16.mxu0 %v1708
        %1740 = vmatpush1.bf16.msra.mxu0 %v1707
        %1741 = vmatprep.subr.bf16.mxu0 %v1710
        %1742 = vmatpush1.bf16.msra.mxu0 %v1709
        %1743 = vmatprep.subr.bf16.mxu0 %v1712
        %1744 = vmatpush1.bf16.msra.mxu0 %v1711
        %1745 = vmatprep.subr.bf16.mxu0 %v1714
        %1746 = vmatpush1.bf16.msra.mxu0 %v1713
        %1747 = vmatprep.subr.bf16.mxu0 %v1716
        %1748 = vmatpush1.bf16.msra.mxu0 %v1715
        %1749 = vmatprep.subr.bf16.mxu0 %v1718
        %1750 = vmatpush1.bf16.msra.mxu0 %v1717
        %1751 = vmatprep.subr.bf16.mxu0 %v1720
        %1752 = vmatpush1.bf16.msra.mxu0 %v1719
        %1753 = vmatprep.subr.bf16.mxu0 0
        %1754 = vmatpush1.bf16.msra.mxu0 0
        %1755 = vmatprep.subr.bf16.mxu0 0
        %1756 = vmatpush1.bf16.msra.mxu0 0
        %1757 = vmatprep.subr.bf16.mxu0 0
        %1758 = vmatpush1.bf16.msra.mxu0 0
        %1759 = vmatprep.subr.bf16.mxu0 0
        %1760 = vmatpush1.bf16.msra.mxu0 0
        %1761 = vmatprep.subr.bf16.mxu0 0
        %1762 = vmatpush1.bf16.msra.mxu0 0
        %1763 = vmatprep.subr.bf16.mxu0 0
        %1764 = vmatpush1.bf16.msra.mxu0 0
        %1765 = vmatprep.subr.bf16.mxu0 0
        %1766 = vmatpush1.bf16.msra.mxu0 0
        %1767 = vmatprep.subr.bf16.mxu0 0
        %1768 = vmatpush1.bf16.msra.mxu0 0
        %1769 = vmatprep.mubr.bf16.mxu0 0
        %1770 = vmatmul.mubr.bf16.gmra.mrb[0].mxu0 %v1628
        %v1771 = vpop.f32.mrb[0].mxu0
        %v1772 = vadd.f32 %v1650, %v1771
        %v1773 = vpop.f32.mrb[0].mxu0
        %v1774 = vadd.f32 %v1654, %v1773
        %v1775 = vpop.f32.mrb[0].mxu0
        %v1776 = vadd.f32 %v1650, %v1775
        %v1777 = vpop.f32.mrb[0].mxu0
        %v1778 = vadd.f32 %v1654, %v1777
        %1779 = vdwg.mxu0
        %v1780 = vmul.f32 %v1772, 0.5
        %v1781 = vmul.f32 %v1774, 0.5
        %v1782 = vmul.f32 %v1776, 0.5
        %v1783 = vmul.f32 %v1778, 0.5
        %v1784 = vmul.f32 %v1772, 0.70710677
        %v1785 = vmul.f32 %v1774, 0.70710677
        %v1786 = vmul.f32 %v1776, 0.70710677
        %v1787 = vmul.f32 %v1778, 0.70710677
        %v1788 = verf.f32.pop %v1784
        %v1789 = verf.f32.pop %v1785
        %v1790 = verf.f32.pop %v1786
        %v1791 = verf.f32.pop %v1787
        %v1792 = vadd.f32 %v1788, 1.0
        %v1793 = vadd.f32 %v1789, 1.0
        %v1794 = vadd.f32 %v1790, 1.0
        %v1795 = vadd.f32 %v1791, 1.0
        %v1796 = vmul.f32 %v1780, %v1792
        %v1797 = vmul.f32 %v1781, %v1793
        %v1798 = vmul.f32 %v1782, %v1794
        %v1799 = vmul.f32 %v1783, %v1795
        %v1800 = vpack.c.bf16 %v1798, %v1796
        %v1801 = vpack.c.bf16 %v1799, %v1797
        %v1802 = vld [vmem:[#allocation14] sm:$0xf]
        %v1803 = vld [vmem:[#allocation14 + $0x4] sm:$0xf]
        %v1804 = vld [vmem:[#allocation14 + $0x8] sm:$0xf]
        %v1805 = vld [vmem:[#allocation14 + $0xc] sm:$0xf]
        %v1806 = vld [vmem:[#allocation14 + $0x10] sm:$0xf]
        %v1807 = vld [vmem:[#allocation14 + $0x14] sm:$0xf]
        %v1808 = vld [vmem:[#allocation14 + $0x18] sm:$0xf]
        %v1809 = vld [vmem:[#allocation14 + $0x1c] sm:$0xf]
        %v1810 = vld [vmem:[#allocation14 + $0x20] sm:$0xf]
        %v1811 = vld [vmem:[#allocation14 + $0x24] sm:$0xf]
        %v1812 = vld [vmem:[#allocation14 + $0x28] sm:$0xf]
        %v1813 = vld [vmem:[#allocation14 + $0x2c] sm:$0xf]
        %v1814 = vld [vmem:[#allocation14 + $0x30] sm:$0xf]
        %v1815 = vld [vmem:[#allocation14 + $0x34] sm:$0xf]
        %v1816 = vld [vmem:[#allocation14 + $0x38] sm:$0xf]
        %v1817 = vld [vmem:[#allocation14 + $0x3c] sm:$0xf]
        %v1818 = vld [vmem:[#allocation14 + $0x40] sm:$0xf]
        %v1819 = vld [vmem:[#allocation14 + $0x44] sm:$0xf]
        %v1820 = vld [vmem:[#allocation14 + $0x48] sm:$0xf]
        %v1821 = vld [vmem:[#allocation14 + $0x4c] sm:$0xf]
        %v1822 = vld [vmem:[#allocation14 + $0x50] sm:$0xf]
        %v1823 = vld [vmem:[#allocation14 + $0x54] sm:$0xf]
        %v1824 = vld [vmem:[#allocation14 + $0x58] sm:$0xf]
        %v1825 = vld [vmem:[#allocation14 + $0x5c] sm:$0xf]
        %v1826 = vld [vmem:[#allocation14 + $0x60] sm:$0xf]
        %v1827 = vld [vmem:[#allocation14 + $0x64] sm:$0xf]
        %v1828 = vld [vmem:[#allocation14 + $0x68] sm:$0xf]
        %v1829 = vld [vmem:[#allocation14 + $0x6c] sm:$0xf]
        %v1830 = vld [vmem:[#allocation14 + $0x70] sm:$0xf]
        %v1831 = vld [vmem:[#allocation14 + $0x74] sm:$0xf]
        %v1832 = vld [vmem:[#allocation14 + $0x78] sm:$0xf]
        %v1833 = vld [vmem:[#allocation14 + $0x7c] sm:$0xf]
        %v1834 = vld [vmem:[%s15] sm:$0x1]
        %v1836 = vlaneseq
        %v1837 = vshrl.u32 %v1836, 7
        %v1838 = vsub.s32 0, %v1837
        %v1839 = vrot.slane %v1834, %v1838
        %v1873 = vunpack.c.l.b16 %v1802
        %v1874 = vunpack.c.l.b16 %v1803
        %v1875 = vunpack.c.l.b16 %v1804
        %v1876 = vunpack.c.l.b16 %v1805
        %v1877 = vunpack.c.l.b16 %v1806
        %v1878 = vunpack.c.l.b16 %v1807
        %v1879 = vunpack.c.l.b16 %v1808
        %v1880 = vunpack.c.l.b16 %v1809
        %v1881 = vunpack.c.l.b16 %v1810
        %v1882 = vunpack.c.l.b16 %v1811
        %v1883 = vunpack.c.l.b16 %v1812
        %v1884 = vunpack.c.l.b16 %v1813
        %v1885 = vunpack.c.l.b16 %v1814
        %v1886 = vunpack.c.l.b16 %v1815
        %v1887 = vunpack.c.l.b16 %v1816
        %v1888 = vunpack.c.l.b16 %v1817
        %v1889 = vunpack.c.l.b16 %v1818
        %v1890 = vunpack.c.l.b16 %v1819
        %v1891 = vunpack.c.l.b16 %v1820
        %v1892 = vunpack.c.l.b16 %v1821
        %v1893 = vunpack.c.l.b16 %v1822
        %v1894 = vunpack.c.l.b16 %v1823
        %v1895 = vunpack.c.l.b16 %v1824
        %v1896 = vunpack.c.l.b16 %v1825
        %v1897 = vunpack.c.l.b16 %v1826
        %v1898 = vunpack.c.l.b16 %v1827
        %v1899 = vunpack.c.l.b16 %v1828
        %v1900 = vunpack.c.l.b16 %v1829
        %v1901 = vunpack.c.l.b16 %v1830
        %v1902 = vunpack.c.l.b16 %v1831
        %v1903 = vunpack.c.l.b16 %v1832
        %v1904 = vunpack.c.l.b16 %v1833
        %v1905 = vpack.c.b16 %v1874, %v1873
        %v1906 = vpack.c.b16 %v1876, %v1875
        %v1907 = vpack.c.b16 %v1878, %v1877
        %v1908 = vpack.c.b16 %v1880, %v1879
        %v1909 = vpack.c.b16 %v1882, %v1881
        %v1910 = vpack.c.b16 %v1884, %v1883
        %v1911 = vpack.c.b16 %v1886, %v1885
        %v1912 = vpack.c.b16 %v1888, %v1887
        %v1913 = vpack.c.b16 %v1890, %v1889
        %v1914 = vpack.c.b16 %v1892, %v1891
        %v1915 = vpack.c.b16 %v1894, %v1893
        %v1916 = vpack.c.b16 %v1896, %v1895
        %v1917 = vpack.c.b16 %v1898, %v1897
        %v1918 = vpack.c.b16 %v1900, %v1899
        %v1919 = vpack.c.b16 %v1902, %v1901
        %v1920 = vpack.c.b16 %v1904, %v1903
        %1937 = vmatprep.subr.bf16.mxu0 0
        %1938 = vmatpush1.bf16.msra.mxu0 %v1905
        %1939 = vmatprep.subr.bf16.mxu0 0
        %1940 = vmatpush1.bf16.msra.mxu0 %v1906
        %1941 = vmatprep.subr.bf16.mxu0 0
        %1942 = vmatpush1.bf16.msra.mxu0 %v1907
        %1943 = vmatprep.subr.bf16.mxu0 0
        %1944 = vmatpush1.bf16.msra.mxu0 %v1908
        %1945 = vmatprep.subr.bf16.mxu0 0
        %1946 = vmatpush1.bf16.msra.mxu0 %v1909
        %1947 = vmatprep.subr.bf16.mxu0 0
        %1948 = vmatpush1.bf16.msra.mxu0 %v1910
        %1949 = vmatprep.subr.bf16.mxu0 0
        %1950 = vmatpush1.bf16.msra.mxu0 %v1911
        %1951 = vmatprep.subr.bf16.mxu0 0
        %1952 = vmatpush1.bf16.msra.mxu0 %v1912
        %1953 = vmatprep.subr.bf16.mxu0 0
        %1954 = vmatpush1.bf16.msra.mxu0 %v1913
        %1955 = vmatprep.subr.bf16.mxu0 0
        %1956 = vmatpush1.bf16.msra.mxu0 %v1914
        %1957 = vmatprep.subr.bf16.mxu0 0
        %1958 = vmatpush1.bf16.msra.mxu0 %v1915
        %1959 = vmatprep.subr.bf16.mxu0 0
        %1960 = vmatpush1.bf16.msra.mxu0 %v1916
        %1961 = vmatprep.subr.bf16.mxu0 0
        %1962 = vmatpush1.bf16.msra.mxu0 %v1917
        %1963 = vmatprep.subr.bf16.mxu0 0
        %1964 = vmatpush1.bf16.msra.mxu0 %v1918
        %1965 = vmatprep.subr.bf16.mxu0 0
        %1966 = vmatpush1.bf16.msra.mxu0 %v1919
        %1967 = vmatprep.subr.bf16.mxu0 0
        %1968 = vmatpush1.bf16.msra.mxu0 %v1920
        %1969 = vmatprep.mubr.bf16.mxu0 %v1801
        %1970 = vmatmul.mubr.bf16.gmra.mrb[0].mxu0 %v1800
        %v1971 = vpop.f32.mrb[0].mxu0
        %v1972 = vadd.f32 %v1839, %v1971
        %v1973 = vpop.f32.mrb[0].mxu0
        %v1974 = vpop.f32.mrb[0].mxu0
        %v1975 = vadd.f32 %v1839, %v1974
        %v1976 = vpop.f32.mrb[0].mxu0
        %1977 = vdwg.mxu0
        %v1978 = vadd.f32 %v1586, %v1972
        %v1979 = vadd.f32 %v1587, %v1975
        %1980 = vst [vmem:[%s651] sm:$0xff] %v1978
        %1981 = vst [vmem:[%s651 + $0x8] sm:$0xff] %v1979
        %s1982 = sand.u32 %s392, 1
        %s1983 = scalar_lea.sflag [#allocation5], %s1982
        %s1984 = sand.u32 %s392, 1
        %s1985 = smul.addr %s1984, 16
        %s1986 = scalar_lea.vmem [#allocation15], %s1985
        // Predicated region
        $region113: #{tpu_custom_call.1} parent=83 // pred_check
          %p1987 = pneg %p402
        $region114: #{tpu_custom_call.1} parent=83 // pred_check_branch
          %1989 = sbr.rel (%p1987) target = $region116
        $region115: #{tpu_custom_call.1} parent=83 // pred_region
          %s1991 = ssub.s32 256, 256
          %1992 = vsyncadd %s1983, %s1991
          %s1993 = smul.addr %s38, 2
          %s1994 = smul.addr %s1993, 128
          %s1995 = scalar_lea.hbm %s16, %s1994
          %s1996 = sshll.u32 %s1986, 4
          %s1997 = int_to_ptr.vmem [resolvable:$true] %s1996
          %2002 = dma.vmem_to_hbm [thread:$0]  %s1997, 256, %s1995, %s1983, 128, 128, 8
        $region116: #{tpu_custom_call.1} parent=83 // pred_fallthru
          _
      $region84: #{tpu_custom_call.1} parent=5 // pred_fallthru
        _
      %p2003 = scmp.le.s32.totalorder 2, %s33
      // Predicated region
      $region117: #{tpu_custom_call.1} parent=5 // pred_check
        %p2004 = pneg %p2003
      $region118: #{tpu_custom_call.1} parent=5 // pred_check_branch
        %2006 = sbr.rel (%p2004) target = $region120
      $region119: #{tpu_custom_call.1} parent=5 // pred_region
        %s2007 = ssub.s32 %s33, 2
        // Predicated region
        $region121: #{tpu_custom_call.1} parent=119 // pred_check
          %p2008 = pneg %p408
        $region122: #{tpu_custom_call.1} parent=119 // pred_check_branch
          %2010 = sbr.rel (%p2008) target = $region124
        $region123: #{tpu_custom_call.1} parent=119 // pred_region
          %s2011 = sand.u32 %s393, 1
          %s2012 = scalar_lea.sflag [#allocation5], %s2011
          %s2013 = sand.u32 %s393, 1
          %s2014 = smul.addr %s2013, 16
          %s2015 = scalar_lea.vmem [#allocation15], %s2014
          %2016 = dma.done %s2012, 256
        $region124: #{tpu_custom_call.1} parent=119 // pred_fallthru
          _
      $region120: #{tpu_custom_call.1} parent=5 // pred_fallthru
        _
    $region6: #{tpu_custom_call.1} parent=1 // loop_footer
      %s37 = sadd.s32 1, %s33
    $region7: #{tpu_custom_call.1} parent=1 // loop_footer_branch
      %32 = sbr.rel target = $region3
    $region8: #{tpu_custom_call.1} parent=1 // loop_exit
      _
    %2017 = vsyncpa [#allocation4], 1
    %s2018 = scalar_lea.sflag [#allocation4], 1
    %2019 = vsyncpa %s2018, 1
    %2020 = vsyncpa [#allocation7], 1
    %s2021 = scalar_lea.sflag [#allocation7], 1
    %2022 = vsyncpa %s2021, 1
    %2023 = vsyncpa [#allocation10], 1
    %2024 = vsyncpa [#allocation13], 1
    %2025 = vsyncpa [#allocation5], 1
    %s2026 = scalar_lea.sflag [#allocation5], 1
    %2027 = vsyncpa %s2026, 1

</llo_original>
